<compile_context>
chip_gen: v5e
topology: v5e:2x2
jax: 0.10.0
libtpu: 0.0.40
codegen_flags: <defaults>
</compile_context>

<pallas_src>
import functools

import jax
import jax.numpy as jnp
from jax.experimental import pallas as pl
from jax.experimental.pallas import tpu as pltpu

_LANE = 128     # lane width: pad hidden / gene dims to multiples of this
_SUBLANE = 8    # sublane width: batch tile granularity


def _round_up(x, m):
    return -(-x // m) * m


def _stable_softplus(x):
    # Matches F.softplus numerics: log(1 + exp(x)), numerically stable.
    return jnp.maximum(x, 0.0) + jnp.log1p(jnp.exp(-jnp.abs(x)))


def _count_kernel(n_base, *refs):
    """Fused MLP kernel over a 2-D grid (batch tile i, gene tile j).

    refs = (x,
            w_base_0, b_base_0, ..., w_base_{n-1}, b_base_{n-1},
            w_mean, b_mean, w_disp, b_disp,        # gene-tiled head params
            mean_out, disp_out,                    # gene-tiled outputs
            h_scratch)                             # VMEM, persists across j
    """
    x_ref = refs[0]
    base_refs = refs[1: 1 + 2 * n_base]
    w_mean_ref, b_mean_ref, w_disp_ref, b_disp_ref = refs[1 + 2 * n_base: 5 + 2 * n_base]
    mean_ref, disp_ref = refs[5 + 2 * n_base: 7 + 2 * n_base]
    h_ref = refs[7 + 2 * n_base]

    # Base Linear+ReLU stack: compute once per batch tile (gene step 0) and
    # keep it in VMEM scratch for all subsequent gene tiles of the same i.
    @pl.when(pl.program_id(1) == 0)
    def _():
        h = x_ref[...]
        for i in range(n_base):
            w = base_refs[2 * i][...]
            b = base_refs[2 * i + 1][...]
            z = jnp.dot(h, w, preferred_element_type=jnp.float32) + b
            h = jnp.maximum(z, 0.0).astype(h_ref.dtype)   # nn.ReLU()
        h_ref[...] = h

    h = h_ref[...]
    # Two separate head dots feeding their epilogues directly (LHS reused).
    zm = jnp.dot(h, w_mean_ref[...], preferred_element_type=jnp.float32) + b_mean_ref[...]
    zd = jnp.dot(h, w_disp_ref[...], preferred_element_type=jnp.float32) + b_disp_ref[...]

    # MeanAct = clamp(exp(.), 1e-5, 1e6); DispAct = clamp(softplus(.), 1e-4, 1e4)
    mean_ref[...] = jnp.clip(jnp.exp(zm), 1e-5, 1e6).astype(mean_ref.dtype)
    disp_ref[...] = jnp.clip(_stable_softplus(zd), 1e-4, 1e4).astype(disp_ref.dtype)


# ----------------------- one-time parameter preparation ----------------------

def prepare_count_model_params(base_params, mean_params, disp_params,
                               *, compute_dtype=jnp.bfloat16):
    """Pads / casts weights once (hoisted out of the per-call path).

    base_params: list of (W, b), W of shape (in, out) [pre-transposed].
    mean_params / disp_params: (W (d1, p), b (p,)).
    Weights -> compute_dtype (bf16 for MXU throughput); biases stay f32.
    """
    d_in = base_params[0][0].shape[0] if base_params else mean_params[0].shape[0]
    p = mean_params[0].shape[1]
    p_pad = _round_up(p, _LANE)

    padded_base = []
    act_width = d_in                      # x's feature dim stays unpadded
    for w, b in base_params:
        out_pad = _round_up(w.shape[1], _LANE)
        w_p = jnp.pad(w, ((0, act_width - w.shape[0]), (0, out_pad - w.shape[1])))
        b_p = jnp.pad(b.reshape(1, -1), ((0, 0), (0, out_pad - w.shape[1])))
        padded_base.append((w_p.astype(compute_dtype), b_p.astype(jnp.float32)))
        act_width = out_pad
    d1_pad = act_width                    # padded width feeding the heads

    def head(wb):
        w, b = wb
        w_p = jnp.pad(w, ((0, d1_pad - w.shape[0]), (0, p_pad - p))).astype(compute_dtype)
        b_p = jnp.pad(b.reshape(1, -1), ((0, 0), (0, p_pad - p))).astype(jnp.float32)
        return w_p, b_p

    w_mean, b_mean = head(mean_params)
    w_disp, b_disp = head(disp_params)

    return dict(base=padded_base, w_mean=w_mean, b_mean=b_mean,
                w_disp=w_disp, b_disp=b_disp,
                d_in=d_in, p=p, p_pad=p_pad, d1_pad=d1_pad,
                compute_dtype=jnp.dtype(compute_dtype))


# --------------------------------- forward ----------------------------------

def _forward_impl(x, prepared, *, tile_b, tile_p, out_dtype, single_buffer_params):
    B, d_in = x.shape
    assert d_in == prepared["d_in"]
    p, p_pad, d1_pad = prepared["p"], prepared["p_pad"], prepared["d1_pad"]
    cdt = prepared["compute_dtype"]
    n_base = len(prepared["base"])

    # Batch tiling: cap tile_b at ceil(B/2) (rounded to sublanes) so the
    # parallel batch axis has >= 2 steps (keeps both v7x TensorCores busy).
    # On v5e/v6e (single TC, 128 MiB VMEM) tile_b up to 512 is also fine.
    cap = _round_up(-(-B // 2), _SUBLANE)
    tile_b = max(_SUBLANE, min(tile_b, cap))
    tile_b -= tile_b % _SUBLANE
    B_pad = _round_up(B, tile_b)

    x_p = x.astype(cdt)
    if B_pad > B:
        x_p = jnp.pad(x_p, ((0, B_pad - B), (0, 0)))

    # Gene tiling: largest multiple of 128 that divides p_pad and is <= tile_p.
    # Default tile_p=2048 keeps the per-step working set v7x-VMEM safe.
    tile_p = max(_LANE, min(tile_p, p_pad))
    tile_p -= tile_p % _LANE
    while p_pad % tile_p:
        tile_p -= _LANE
    grid = (B_pad // tile_b, p_pad // tile_p)

    const_map = lambda i, j: (0, 0)

    def param_spec(shape):
        if single_buffer_params:
            # Resident params: single buffer halves their VMEM footprint.
            return pl.BlockSpec(shape, const_map, pipeline_mode=pl.Buffered(buffer_count=1))
        return pl.BlockSpec(shape, const_map)

    in_specs = [pl.BlockSpec((tile_b, d_in), lambda i, j: (i, 0))]
    flat_params = []
    for w, b in prepared["base"]:
        in_specs += [param_spec(w.shape), param_spec(b.shape)]
        flat_params += [w, b]
    head_w_spec = pl.BlockSpec((d1_pad, tile_p), lambda i, j: (0, j))
    head_b_spec = pl.BlockSpec((1, tile_p), lambda i, j: (0, j))
    in_specs += [head_w_spec, head_b_spec, head_w_spec, head_b_spec]
    flat_params += [prepared["w_mean"], prepared["b_mean"],
                    prepared["w_disp"], prepared["b_disp"]]

    out_specs = (pl.BlockSpec((tile_b, tile_p), lambda i, j: (i, j)),
                 pl.BlockSpec((tile_b, tile_p), lambda i, j: (i, j)))
    out_shape = (jax.ShapeDtypeStruct((B_pad, p_pad), out_dtype),
                 jax.ShapeDtypeStruct((B_pad, p_pad), out_dtype))
    scratch_shapes = [pltpu.VMEM((tile_b, d1_pad), cdt)]

    # VMEM estimate for the chosen tiles (+ headroom), capped at v7x physical.
    nbuf_p = 1 if single_buffer_params else 2
    est = 2 * tile_b * d_in * cdt.itemsize                       # x (dbl-buffered)
    for w, b in prepared["base"]:
        est += nbuf_p * (w.size * w.dtype.itemsize + b.size * b.dtype.itemsize)
    est += 2 * 2 * (d1_pad * tile_p * cdt.itemsize + tile_p * 4)  # head tiles
    est += 2 * 2 * tile_b * tile_p * jnp.dtype(out_dtype).itemsize  # outputs
    est += tile_b * d1_pad * cdt.itemsize                         # h scratch
    vmem_limit = min(max(int(est * 1.4) + (2 << 20), 16 << 20), 64 << 20)

    kernel = functools.partial(_count_kernel, n_base)
    mean, disp = pl.pallas_call(
        kernel,
        grid=grid,
        in_specs=in_specs,
        out_specs=out_specs,
        out_shape=out_shape,
        scratch_shapes=scratch_shapes,
        compiler_params=pltpu.CompilerParams(
            dimension_semantics=("parallel", "arbitrary"),
            vmem_limit_bytes=vmem_limit),
    )(x_p, *flat_params)

    if B_pad > B or p_pad > p:
        mean = mean[:B, :p]
        disp = disp[:B, :p]
    return mean, disp


def count_model_forward(x, prepared, *, tile_b=256, tile_p=2048, out_dtype=jnp.float32):
    """Runs the fused count_model forward pass with pre-prepared parameters.

    Returns (mean, disp), each (B, p).  out_dtype can be set to bf16 if the
    consumer tolerates it (halves the HBM-writeback term).
    """
    try:
        return _forward_impl(x, prepared, tile_b=tile_b, tile_p=tile_p,
                             out_dtype=out_dtype, single_buffer_params=True)
    except Exception:
        # Fallback for jax versions without BlockSpec pipeline_mode support.
        return _forward_impl(x, prepared, tile_b=tile_b, tile_p=tile_p,
                             out_dtype=out_dtype, single_buffer_params=False)


# ----------------------- deterministic parameter init -----------------------

def _xavier_uniform(key, fan_in, fan_out, gain=1.0):
    # Matches nn.init.xavier_uniform_ (default_initialise_weight_bias_, gain=1).
    limit = gain * jnp.sqrt(6.0 / (fan_in + fan_out))
    # Returned already transposed: shape (in, out).
    return jax.random.uniform(
        key, (fan_in, fan_out), minval=-limit, maxval=limit, dtype=jnp.float32)


def init_count_model_params(key, dims):
    """dims = [p, d1, ..., dk] as in the PyTorch module."""
    rev = list(reversed(dims[1:]))  # base layer widths: dk -> ... -> d1
    base_params = []
    for fan_in, fan_out in zip(rev, rev[1:]):
        key, sub = jax.random.split(key)
        w = _xavier_uniform(sub, fan_in, fan_out)
        b = jnp.zeros((fan_out,), jnp.float32)  # bias init: constant 0
        base_params.append((w, b))
    key, sub_m, sub_d = jax.random.split(key, 3)
    mean_params = (_xavier_uniform(sub_m, dims[1], dims[0]),
                   jnp.zeros((dims[0],), jnp.float32))
    disp_params = (_xavier_uniform(sub_d, dims[1], dims[0]),
                   jnp.zeros((dims[0],), jnp.float32))
    return base_params, mean_params, disp_params


def count_model_reference(x, base_params, mean_params, disp_params):
    h = x
    for w, b in base_params:
        h = jnp.maximum(h @ w + b, 0.0)
    mean = jnp.clip(jnp.exp(h @ mean_params[0] + mean_params[1]), 1e-5, 1e6)
    disp = jnp.clip(jax.nn.softplus(h @ disp_params[0] + disp_params[1]), 1e-4, 1e4)
    return mean, disp


if __name__ == "__main__":
    # dims = [p_genes, d1, d2, d3]: input embedding width d3=8, hiddens 16->32,
    # output p=64 genes. base = Linear(8->16)+ReLU, Linear(16->32)+ReLU.
    dims = [64, 32, 16, 8]
    batch = 16

    key = jax.random.PRNGKey(0)
    key, kx = jax.random.split(key)
    x = jax.random.normal(kx, (batch, dims[-1]), dtype=jnp.float32)

    base_params, mean_params, disp_params = init_count_model_params(key, dims)
    mean_ref, disp_ref = count_model_reference(x, base_params, mean_params, disp_params)

    # Default path: bf16 weights/activations on the MXU, f32 accumulation.
    prep_bf16 = prepare_count_model_params(base_params, mean_params, disp_params,
                                           compute_dtype=jnp.bfloat16)
    mean, disp = count_model_forward(x, prep_bf16)
    mean, disp = jax.block_until_ready((mean, disp))
    assert mean.shape == (batch, dims[0]) and disp.shape == (batch, dims[0])
    assert jnp.allclose(mean, mean_ref, rtol=5e-2, atol=1e-3)
    assert jnp.allclose(disp, disp_ref, rtol=5e-2, atol=1e-3)

    # Full-precision path: tight check of kernel structure / tiling logic.
    prep_f32 = prepare_count_model_params(base_params, mean_params, disp_params,
                                          compute_dtype=jnp.float32)
    mean32, disp32 = count_model_forward(x, prep_f32)
    mean32, disp32 = jax.block_until_ready((mean32, disp32))
    assert jnp.allclose(mean32, mean_ref, rtol=1e-5, atol=1e-5)
    assert jnp.allclose(disp32, disp_ref, rtol=1e-5, atol=1e-5)

    # TODO(synk): training loop / denoise / weight-file I/O from the PyTorch
    # class are host-side machinery and are intentionally not ported.

    print("KERNEL_OK")
</pallas_src>

<mosaic_0001>
module attributes {stable_mosaic.version = 11 : i64} {
  func.func @_count_kernel(%arg0: i32, %arg1: i32, %arg2: memref<8x8xbf16, #tpu.memory_space<vmem>>, %arg3: memref<8x128xbf16, #tpu.memory_space<vmem>>, %arg4: memref<1x128xf32, #tpu.memory_space<vmem>>, %arg5: memref<128x128xbf16, #tpu.memory_space<vmem>>, %arg6: memref<1x128xf32, #tpu.memory_space<vmem>>, %arg7: memref<128x128xbf16, #tpu.memory_space<vmem>>, %arg8: memref<1x128xf32, #tpu.memory_space<vmem>>, %arg9: memref<128x128xbf16, #tpu.memory_space<vmem>>, %arg10: memref<1x128xf32, #tpu.memory_space<vmem>>, %arg11: memref<8x128xf32, #tpu.memory_space<vmem>>, %arg12: memref<8x128xf32, #tpu.memory_space<vmem>>, %arg13: memref<8x128xbf16, #tpu.memory_space<vmem>>) attributes {dimension_semantics = [#tpu.dimension_semantics<parallel>, #tpu.dimension_semantics<arbitrary>], iteration_bounds = array<i64: 2, 1>, scalar_prefetch = 0 : i64, scratch_operands = 1 : i64, tpu.core_type = #tpu.core_type<tc>, window_params = [{transform_indices = @transform_0, window_bounds = array<i64: 8, 8>}, {pipeline_mode = #tpu.pipeline_mode<synchronous>, transform_indices = @transform_1, window_bounds = array<i64: 8, 128>}, {pipeline_mode = #tpu.pipeline_mode<synchronous>, transform_indices = @transform_2, window_bounds = array<i64: 1, 128>}, {pipeline_mode = #tpu.pipeline_mode<synchronous>, transform_indices = @transform_3, window_bounds = array<i64: 128, 128>}, {pipeline_mode = #tpu.pipeline_mode<synchronous>, transform_indices = @transform_4, window_bounds = array<i64: 1, 128>}, {transform_indices = @transform_5, window_bounds = array<i64: 128, 128>}, {transform_indices = @transform_6, window_bounds = array<i64: 1, 128>}, {transform_indices = @transform_7, window_bounds = array<i64: 128, 128>}, {transform_indices = @transform_8, window_bounds = array<i64: 1, 128>}, {transform_indices = @transform_9, window_bounds = array<i64: 8, 128>}, {transform_indices = @transform_10, window_bounds = array<i64: 8, 128>}]} {
    %c0_i32 = arith.constant 0 : i32
    %0 = arith.cmpi eq, %arg1, %c0_i32 : i32
    %1 = arith.extui %0 : i1 to i32
    %c0_i32_0 = arith.constant 0 : i32
    %2 = arith.cmpi ne, %1, %c0_i32_0 : i32
    scf.if %2 {
      %c0_21 = arith.constant 0 : index
      %c0_22 = arith.constant 0 : index
      %33 = vector.load %arg2[%c0_21, %c0_22] : memref<8x8xbf16, #tpu.memory_space<vmem>>, vector<8x8xbf16>
      %c0_23 = arith.constant 0 : index
      %c0_24 = arith.constant 0 : index
      %34 = vector.load %arg3[%c0_23, %c0_24] : memref<8x128xbf16, #tpu.memory_space<vmem>>, vector<8x128xbf16>
      %c0_25 = arith.constant 0 : index
      %c0_26 = arith.constant 0 : index
      %35 = vector.load %arg4[%c0_25, %c0_26] : memref<1x128xf32, #tpu.memory_space<vmem>>, vector<1x128xf32>
      %cst_27 = arith.constant dense<0.000000e+00> : vector<8x128xf32>
      %36 = tpu.matmul %33, %34, %cst_27 {dimension_numbers = #tpu.dot_dimension_numbers<[1], [0], [0], [1], [0, 0, 1, 1], [], []>} : vector<8x8xbf16>, vector<8x128xbf16>, vector<8x128xf32> -> vector<8x128xf32>
      %37 = vector.broadcast %35 : vector<1x128xf32> to vector<8x128xf32>
      %38 = arith.addf %36, %37 : vector<8x128xf32>
      %cst_28 = arith.constant 0.000000e+00 : f32
      %39 = vector.broadcast %cst_28 : f32 to vector<8x128xf32>
      %40 = arith.maximumf %38, %39 : vector<8x128xf32>
      %41 = arith.truncf %40 : vector<8x128xf32> to vector<8x128xbf16>
      %c0_29 = arith.constant 0 : index
      %c0_30 = arith.constant 0 : index
      %42 = vector.load %arg5[%c0_29, %c0_30] : memref<128x128xbf16, #tpu.memory_space<vmem>>, vector<128x128xbf16>
      %c0_31 = arith.constant 0 : index
      %c0_32 = arith.constant 0 : index
      %43 = vector.load %arg6[%c0_31, %c0_32] : memref<1x128xf32, #tpu.memory_space<vmem>>, vector<1x128xf32>
      %cst_33 = arith.constant dense<0.000000e+00> : vector<8x128xf32>
      %44 = tpu.matmul %41, %42, %cst_33 {dimension_numbers = #tpu.dot_dimension_numbers<[1], [0], [0], [1], [0, 0, 1, 1], [], []>} : vector<8x128xbf16>, vector<128x128xbf16>, vector<8x128xf32> -> vector<8x128xf32>
      %45 = vector.broadcast %43 : vector<1x128xf32> to vector<8x128xf32>
      %46 = arith.addf %44, %45 : vector<8x128xf32>
      %cst_34 = arith.constant 0.000000e+00 : f32
      %47 = vector.broadcast %cst_34 : f32 to vector<8x128xf32>
      %48 = arith.maximumf %46, %47 : vector<8x128xf32>
      %49 = arith.truncf %48 : vector<8x128xf32> to vector<8x128xbf16>
      %c0_35 = arith.constant 0 : index
      %c0_36 = arith.constant 0 : index
      %50 = vector.load %arg13[%c0_35, %c0_36] : memref<8x128xbf16, #tpu.memory_space<vmem>>, vector<8x128xbf16>
      tpu.vector_store %arg13[%c0_35, %c0_36], %49 {strides = array<i32>} : memref<8x128xbf16, #tpu.memory_space<vmem>>, vector<8x128xbf16>,
    } else {
    }
    %c0 = arith.constant 0 : index
    %c0_1 = arith.constant 0 : index
    %3 = vector.load %arg13[%c0, %c0_1] : memref<8x128xbf16, #tpu.memory_space<vmem>>, vector<8x128xbf16>
    %c0_2 = arith.constant 0 : index
    %c0_3 = arith.constant 0 : index
    %4 = vector.load %arg7[%c0_2, %c0_3] : memref<128x128xbf16, #tpu.memory_space<vmem>>, vector<128x128xbf16>
    %cst = arith.constant dense<0.000000e+00> : vector<8x128xf32>
    %5 = tpu.matmul %3, %4, %cst {dimension_numbers = #tpu.dot_dimension_numbers<[1], [0], [0], [1], [0, 0, 1, 1], [], []>} : vector<8x128xbf16>, vector<128x128xbf16>, vector<8x128xf32> -> vector<8x128xf32>
    %c0_4 = arith.constant 0 : index
    %c0_5 = arith.constant 0 : index
    %6 = vector.load %arg8[%c0_4, %c0_5] : memref<1x128xf32, #tpu.memory_space<vmem>>, vector<1x128xf32>
    %7 = vector.broadcast %6 : vector<1x128xf32> to vector<8x128xf32>
    %8 = arith.addf %5, %7 : vector<8x128xf32>
    %c0_6 = arith.constant 0 : index
    %c0_7 = arith.constant 0 : index
    %9 = vector.load %arg9[%c0_6, %c0_7] : memref<128x128xbf16, #tpu.memory_space<vmem>>, vector<128x128xbf16>
    %cst_8 = arith.constant dense<0.000000e+00> : vector<8x128xf32>
    %10 = tpu.matmul %3, %9, %cst_8 {dimension_numbers = #tpu.dot_dimension_numbers<[1], [0], [0], [1], [0, 0, 1, 1], [], []>} : vector<8x128xbf16>, vector<128x128xbf16>, vector<8x128xf32> -> vector<8x128xf32>
    %c0_9 = arith.constant 0 : index
    %c0_10 = arith.constant 0 : index
    %11 = vector.load %arg10[%c0_9, %c0_10] : memref<1x128xf32, #tpu.memory_space<vmem>>, vector<1x128xf32>
    %12 = vector.broadcast %11 : vector<1x128xf32> to vector<8x128xf32>
    %13 = arith.addf %10, %12 : vector<8x128xf32>
    %14 = math.exp %8 : vector<8x128xf32>
    %cst_11 = arith.constant 9.99999974E-6 : f32
    %cst_12 = arith.constant 1.000000e+06 : f32
    %15 = vector.broadcast %cst_11 : f32 to vector<8x128xf32>
    %16 = arith.maximumf %15, %14 : vector<8x128xf32>
    %17 = vector.broadcast %cst_12 : f32 to vector<8x128xf32>
    %18 = arith.minimumf %17, %16 : vector<8x128xf32>
    %c0_13 = arith.constant 0 : index
    %c0_14 = arith.constant 0 : index
    %19 = vector.load %arg11[%c0_13, %c0_14] : memref<8x128xf32, #tpu.memory_space<vmem>>, vector<8x128xf32>
    tpu.vector_store %arg11[%c0_13, %c0_14], %18 {strides = array<i32>} : memref<8x128xf32, #tpu.memory_space<vmem>>, vector<8x128xf32>,
    %cst_15 = arith.constant 0.000000e+00 : f32
    %20 = vector.broadcast %cst_15 : f32 to vector<8x128xf32>
    %21 = arith.maximumf %13, %20 : vector<8x128xf32>
    %22 = math.absf %13 : vector<8x128xf32>
    %cst_16 = arith.constant 0.000000e+00 : f32
    %23 = vector.broadcast %cst_16 : f32 to vector<8x128xf32>
    %24 = arith.subf %23, %22 : vector<8x128xf32>
    %25 = math.exp %24 : vector<8x128xf32>
    %26 = math.log1p %25 : vector<8x128xf32>
    %27 = arith.addf %21, %26 : vector<8x128xf32>
    %cst_17 = arith.constant 9.99999974E-5 : f32
    %cst_18 = arith.constant 1.000000e+04 : f32
    %28 = vector.broadcast %cst_17 : f32 to vector<8x128xf32>
    %29 = arith.maximumf %28, %27 : vector<8x128xf32>
    %30 = vector.broadcast %cst_18 : f32 to vector<8x128xf32>
    %31 = arith.minimumf %30, %29 : vector<8x128xf32>
    %c0_19 = arith.constant 0 : index
    %c0_20 = arith.constant 0 : index
    %32 = vector.load %arg12[%c0_19, %c0_20] : memref<8x128xf32, #tpu.memory_space<vmem>>, vector<8x128xf32>
    tpu.vector_store %arg12[%c0_19, %c0_20], %31 {strides = array<i32>} : memref<8x128xf32, #tpu.memory_space<vmem>>, vector<8x128xf32>,
    return
  }
  func.func @transform_0(%arg0: i32, %arg1: i32) -> (i32, i32) {
    %c0_i32 = arith.constant 0 : i32
    %c0_i32_0 = arith.constant 0 : i32
    return %arg0, %c0_i32 : i32, i32
  }
  func.func @transform_1(%arg0: i32, %arg1: i32) -> (i32, i32) {
    %c0_i32 = arith.constant 0 : i32
    %c0_i32_0 = arith.constant 0 : i32
    %c0_i32_1 = arith.constant 0 : i32
    return %c0_i32, %c0_i32_0 : i32, i32
  }
  func.func @transform_2(%arg0: i32, %arg1: i32) -> (i32, i32) {
    %c0_i32 = arith.constant 0 : i32
    %c0_i32_0 = arith.constant 0 : i32
    %c0_i32_1 = arith.constant 0 : i32
    return %c0_i32, %c0_i32_0 : i32, i32
  }
  func.func @transform_3(%arg0: i32, %arg1: i32) -> (i32, i32) {
    %c0_i32 = arith.constant 0 : i32
    %c0_i32_0 = arith.constant 0 : i32
    %c0_i32_1 = arith.constant 0 : i32
    return %c0_i32, %c0_i32_0 : i32, i32
  }
  func.func @transform_4(%arg0: i32, %arg1: i32) -> (i32, i32) {
    %c0_i32 = arith.constant 0 : i32
    %c0_i32_0 = arith.constant 0 : i32
    %c0_i32_1 = arith.constant 0 : i32
    return %c0_i32, %c0_i32_0 : i32, i32
  }
  func.func @transform_5(%arg0: i32, %arg1: i32) -> (i32, i32) {
    %c0_i32 = arith.constant 0 : i32
    %c0_i32_0 = arith.constant 0 : i32
    return %c0_i32, %arg1 : i32, i32
  }
  func.func @transform_6(%arg0: i32, %arg1: i32) -> (i32, i32) {
    %c0_i32 = arith.constant 0 : i32
    %c0_i32_0 = arith.constant 0 : i32
    return %c0_i32, %arg1 : i32, i32
  }
  func.func @transform_7(%arg0: i32, %arg1: i32) -> (i32, i32) {
    %c0_i32 = arith.constant 0 : i32
    %c0_i32_0 = arith.constant 0 : i32
    return %c0_i32, %arg1 : i32, i32
  }
  func.func @transform_8(%arg0: i32, %arg1: i32) -> (i32, i32) {
    %c0_i32 = arith.constant 0 : i32
    %c0_i32_0 = arith.constant 0 : i32
    return %c0_i32, %arg1 : i32, i32
  }
  func.func @transform_9(%arg0: i32, %arg1: i32) -> (i32, i32) {
    %c0_i32 = arith.constant 0 : i32
    return %arg0, %arg1 : i32, i32
  }
  func.func @transform_10(%arg0: i32, %arg1: i32) -> (i32, i32) {
    %c0_i32 = arith.constant 0 : i32
    return %arg0, %arg1 : i32, i32
  }
}

module attributes {stable_mosaic.version = 11 : i64} {
  func.func @_count_kernel(%arg0: i32, %arg1: i32, %arg2: memref<8x8xbf16, #tpu.memory_space<vmem>>, %arg3: memref<8x128xbf16, #tpu.memory_space<vmem>>, %arg4: memref<1x128xf32, #tpu.memory_space<vmem>>, %arg5: memref<128x128xbf16, #tpu.memory_space<vmem>>, %arg6: memref<1x128xf32, #tpu.memory_space<vmem>>, %arg7: memref<128x128xbf16, #tpu.memory_space<vmem>>, %arg8: memref<1x128xf32, #tpu.memory_space<vmem>>, %arg9: memref<128x128xbf16, #tpu.memory_space<vmem>>, %arg10: memref<1x128xf32, #tpu.memory_space<vmem>>, %arg11: memref<8x128xf32, #tpu.memory_space<vmem>>, %arg12: memref<8x128xf32, #tpu.memory_space<vmem>>, %arg13: memref<8x128xbf16, #tpu.memory_space<vmem>>) attributes {dimension_semantics = [#tpu.dimension_semantics<parallel>, #tpu.dimension_semantics<arbitrary>], iteration_bounds = array<i64: 2, 1>, scalar_prefetch = 0 : i64, scratch_operands = 1 : i64, tpu.core_type = #tpu.core_type<tc>, window_params = [{transform_indices = @transform_0, window_bounds = array<i64: 8, 8>}, {pipeline_mode = #tpu.pipeline_mode<synchronous>, transform_indices = @transform_1, window_bounds = array<i64: 8, 128>}, {pipeline_mode = #tpu.pipeline_mode<synchronous>, transform_indices = @transform_2, window_bounds = array<i64: 1, 128>}, {pipeline_mode = #tpu.pipeline_mode<synchronous>, transform_indices = @transform_3, window_bounds = array<i64: 128, 128>}, {pipeline_mode = #tpu.pipeline_mode<synchronous>, transform_indices = @transform_4, window_bounds = array<i64: 1, 128>}, {transform_indices = @transform_5, window_bounds = array<i64: 128, 128>}, {transform_indices = @transform_6, window_bounds = array<i64: 1, 128>}, {transform_indices = @transform_7, window_bounds = array<i64: 128, 128>}, {transform_indices = @transform_8, window_bounds = array<i64: 1, 128>}, {transform_indices = @transform_9, window_bounds = array<i64: 8, 128>}, {transform_indices = @transform_10, window_bounds = array<i64: 8, 128>}]} {
    %c0_i32 = arith.constant 0 : i32
    %0 = arith.cmpi eq, %arg1, %c0_i32 : i32
    %1 = arith.extui %0 : i1 to i32
    %c0_i32_0 = arith.constant 0 : i32
    %2 = arith.cmpi ne, %1, %c0_i32_0 : i32
    scf.if %2 {
      %c0_21 = arith.constant 0 : index
      %c0_22 = arith.constant 0 : index
      %33 = vector.load %arg2[%c0_21, %c0_22] : memref<8x8xbf16, #tpu.memory_space<vmem>>, vector<8x8xbf16>
      %c0_23 = arith.constant 0 : index
      %c0_24 = arith.constant 0 : index
      %34 = vector.load %arg3[%c0_23, %c0_24] : memref<8x128xbf16, #tpu.memory_space<vmem>>, vector<8x128xbf16>
      %c0_25 = arith.constant 0 : index
      %c0_26 = arith.constant 0 : index
      %35 = vector.load %arg4[%c0_25, %c0_26] : memref<1x128xf32, #tpu.memory_space<vmem>>, vector<1x128xf32>
      %cst_27 = arith.constant dense<0.000000e+00> : vector<8x128xf32>
      %36 = tpu.matmul %33, %34, %cst_27 {dimension_numbers = #tpu.dot_dimension_numbers<[1], [0], [0], [1], [0, 0, 1, 1], [], []>} : vector<8x8xbf16>, vector<8x128xbf16>, vector<8x128xf32> -> vector<8x128xf32>
      %37 = vector.broadcast %35 : vector<1x128xf32> to vector<8x128xf32>
      %38 = arith.addf %36, %37 : vector<8x128xf32>
      %cst_28 = arith.constant 0.000000e+00 : f32
      %39 = vector.broadcast %cst_28 : f32 to vector<8x128xf32>
      %40 = arith.maximumf %38, %39 : vector<8x128xf32>
      %41 = arith.truncf %40 : vector<8x128xf32> to vector<8x128xbf16>
      %c0_29 = arith.constant 0 : index
      %c0_30 = arith.constant 0 : index
      %42 = vector.load %arg5[%c0_29, %c0_30] : memref<128x128xbf16, #tpu.memory_space<vmem>>, vector<128x128xbf16>
      %c0_31 = arith.constant 0 : index
      %c0_32 = arith.constant 0 : index
      %43 = vector.load %arg6[%c0_31, %c0_32] : memref<1x128xf32, #tpu.memory_space<vmem>>, vector<1x128xf32>
      %cst_33 = arith.constant dense<0.000000e+00> : vector<8x128xf32>
      %44 = tpu.matmul %41, %42, %cst_33 {dimension_numbers = #tpu.dot_dimension_numbers<[1], [0], [0], [1], [0, 0, 1, 1], [], []>} : vector<8x128xbf16>, vector<128x128xbf16>, vector<8x128xf32> -> vector<8x128xf32>
      %45 = vector.broadcast %43 : vector<1x128xf32> to vector<8x128xf32>
      %46 = arith.addf %44, %45 : vector<8x128xf32>
      %cst_34 = arith.constant 0.000000e+00 : f32
      %47 = vector.broadcast %cst_34 : f32 to vector<8x128xf32>
      %48 = arith.maximumf %46, %47 : vector<8x128xf32>
      %49 = arith.truncf %48 : vector<8x128xf32> to vector<8x128xbf16>
      %c0_35 = arith.constant 0 : index
      %c0_36 = arith.constant 0 : index
      %50 = vector.load %arg13[%c0_35, %c0_36] : memref<8x128xbf16, #tpu.memory_space<vmem>>, vector<8x128xbf16>
      tpu.vector_store %arg13[%c0_35, %c0_36], %49 {strides = array<i32>} : memref<8x128xbf16, #tpu.memory_space<vmem>>, vector<8x128xbf16>,
    } else {
    }
    %c0 = arith.constant 0 : index
    %c0_1 = arith.constant 0 : index
    %3 = vector.load %arg13[%c0, %c0_1] : memref<8x128xbf16, #tpu.memory_space<vmem>>, vector<8x128xbf16>
    %c0_2 = arith.constant 0 : index
    %c0_3 = arith.constant 0 : index
    %4 = vector.load %arg7[%c0_2, %c0_3] : memref<128x128xbf16, #tpu.memory_space<vmem>>, vector<128x128xbf16>
    %cst = arith.constant dense<0.000000e+00> : vector<8x128xf32>
    %5 = tpu.matmul %3, %4, %cst {dimension_numbers = #tpu.dot_dimension_numbers<[1], [0], [0], [1], [0, 0, 1, 1], [], []>} : vector<8x128xbf16>, vector<128x128xbf16>, vector<8x128xf32> -> vector<8x128xf32>
    %c0_4 = arith.constant 0 : index
    %c0_5 = arith.constant 0 : index
    %6 = vector.load %arg8[%c0_4, %c0_5] : memref<1x128xf32, #tpu.memory_space<vmem>>, vector<1x128xf32>
    %7 = vector.broadcast %6 : vector<1x128xf32> to vector<8x128xf32>
    %8 = arith.addf %5, %7 : vector<8x128xf32>
    %c0_6 = arith.constant 0 : index
    %c0_7 = arith.constant 0 : index
    %9 = vector.load %arg9[%c0_6, %c0_7] : memref<128x128xbf16, #tpu.memory_space<vmem>>, vector<128x128xbf16>
    %cst_8 = arith.constant dense<0.000000e+00> : vector<8x128xf32>
    %10 = tpu.matmul %3, %9, %cst_8 {dimension_numbers = #tpu.dot_dimension_numbers<[1], [0], [0], [1], [0, 0, 1, 1], [], []>} : vector<8x128xbf16>, vector<128x128xbf16>, vector<8x128xf32> -> vector<8x128xf32>
    %c0_9 = arith.constant 0 : index
    %c0_10 = arith.constant 0 : index
    %11 = vector.load %arg10[%c0_9, %c0_10] : memref<1x128xf32, #tpu.memory_space<vmem>>, vector<1x128xf32>
    %12 = vector.broadcast %11 : vector<1x128xf32> to vector<8x128xf32>
    %13 = arith.addf %10, %12 : vector<8x128xf32>
    %14 = math.exp %8 : vector<8x128xf32>
    %cst_11 = arith.constant 9.99999974E-6 : f32
    %cst_12 = arith.constant 1.000000e+06 : f32
    %15 = vector.broadcast %cst_11 : f32 to vector<8x128xf32>
    %16 = arith.maximumf %15, %14 : vector<8x128xf32>
    %17 = vector.broadcast %cst_12 : f32 to vector<8x128xf32>
    %18 = arith.minimumf %17, %16 : vector<8x128xf32>
    %c0_13 = arith.constant 0 : index
    %c0_14 = arith.constant 0 : index
    %19 = vector.load %arg11[%c0_13, %c0_14] : memref<8x128xf32, #tpu.memory_space<vmem>>, vector<8x128xf32>
    tpu.vector_store %arg11[%c0_13, %c0_14], %18 {strides = array<i32>} : memref<8x128xf32, #tpu.memory_space<vmem>>, vector<8x128xf32>,
    %cst_15 = arith.constant 0.000000e+00 : f32
    %20 = vector.broadcast %cst_15 : f32 to vector<8x128xf32>
    %21 = arith.maximumf %13, %20 : vector<8x128xf32>
    %22 = math.absf %13 : vector<8x128xf32>
    %cst_16 = arith.constant 0.000000e+00 : f32
    %23 = vector.broadcast %cst_16 : f32 to vector<8x128xf32>
    %24 = arith.subf %23, %22 : vector<8x128xf32>
    %25 = math.exp %24 : vector<8x128xf32>
    %26 = math.log1p %25 : vector<8x128xf32>
    %27 = arith.addf %21, %26 : vector<8x128xf32>
    %cst_17 = arith.constant 9.99999974E-5 : f32
    %cst_18 = arith.constant 1.000000e+04 : f32
    %28 = vector.broadcast %cst_17 : f32 to vector<8x128xf32>
    %29 = arith.maximumf %28, %27 : vector<8x128xf32>
    %30 = vector.broadcast %cst_18 : f32 to vector<8x128xf32>
    %31 = arith.minimumf %30, %29 : vector<8x128xf32>
    %c0_19 = arith.constant 0 : index
    %c0_20 = arith.constant 0 : index
    %32 = vector.load %arg12[%c0_19, %c0_20] : memref<8x128xf32, #tpu.memory_space<vmem>>, vector<8x128xf32>
    tpu.vector_store %arg12[%c0_19, %c0_20], %31 {strides = array<i32>} : memref<8x128xf32, #tpu.memory_space<vmem>>, vector<8x128xf32>,
    return
  }
  func.func @transform_0(%arg0: i32, %arg1: i32) -> (i32, i32) {
    %c0_i32 = arith.constant 0 : i32
    %c0_i32_0 = arith.constant 0 : i32
    return %arg0, %c0_i32 : i32, i32
  }
  func.func @transform_1(%arg0: i32, %arg1: i32) -> (i32, i32) {
    %c0_i32 = arith.constant 0 : i32
    %c0_i32_0 = arith.constant 0 : i32
    %c0_i32_1 = arith.constant 0 : i32
    return %c0_i32, %c0_i32_0 : i32, i32
  }
  func.func @transform_2(%arg0: i32, %arg1: i32) -> (i32, i32) {
    %c0_i32 = arith.constant 0 : i32
    %c0_i32_0 = arith.constant 0 : i32
    %c0_i32_1 = arith.constant 0 : i32
    return %c0_i32, %c0_i32_0 : i32, i32
  }
  func.func @transform_3(%arg0: i32, %arg1: i32) -> (i32, i32) {
    %c0_i32 = arith.constant 0 : i32
    %c0_i32_0 = arith.constant 0 : i32
    %c0_i32_1 = arith.constant 0 : i32
    return %c0_i32, %c0_i32_0 : i32, i32
  }
  func.func @transform_4(%arg0: i32, %arg1: i32) -> (i32, i32) {
    %c0_i32 = arith.constant 0 : i32
    %c0_i32_0 = arith.constant 0 : i32
    %c0_i32_1 = arith.constant 0 : i32
    return %c0_i32, %c0_i32_0 : i32, i32
  }
  func.func @transform_5(%arg0: i32, %arg1: i32) -> (i32, i32) {
    %c0_i32 = arith.constant 0 : i32
    %c0_i32_0 = arith.constant 0 : i32
    return %c0_i32, %arg1 : i32, i32
  }
  func.func @transform_6(%arg0: i32, %arg1: i32) -> (i32, i32) {
    %c0_i32 = arith.constant 0 : i32
    %c0_i32_0 = arith.constant 0 : i32
    return %c0_i32, %arg1 : i32, i32
  }
  func.func @transform_7(%arg0: i32, %arg1: i32) -> (i32, i32) {
    %c0_i32 = arith.constant 0 : i32
    %c0_i32_0 = arith.constant 0 : i32
    return %c0_i32, %arg1 : i32, i32
  }
  func.func @transform_8(%arg0: i32, %arg1: i32) -> (i32, i32) {
    %c0_i32 = arith.constant 0 : i32
    %c0_i32_0 = arith.constant 0 : i32
    return %c0_i32, %arg1 : i32, i32
  }
  func.func @transform_9(%arg0: i32, %arg1: i32) -> (i32, i32) {
    %c0_i32 = arith.constant 0 : i32
    return %arg0, %arg1 : i32, i32
  }
  func.func @transform_10(%arg0: i32, %arg1: i32) -> (i32, i32) {
    %c0_i32 = arith.constant 0 : i32
    return %arg0, %arg1 : i32, i32
  }
}

</mosaic_0001>

<llo_original>
// kernel: tpu_custom_call.1
$region0: #{tpu_custom_call.1}
  #allocation0 [shape = 'u32[]', space=smem, size = 0x4, offset = 0x4, fixed_abs, tag = 'smem constant byte address 0x4 - core index']
  #allocation1 [shape = 'u32[72,128]{1,0:T(1,128)}', space=vmem, size = 0x9000, scoped, tag = 'internal scratch']
  #allocation2 [shape = 'bf16[8,128]{1,0:T(8,128)(2,1)}', space=vmem, size = 0x800, scoped, tag = 'scratch operand']
  %s0 = inlined_call_operand.vmem [shape: bf16[16,8], index: 0, kind: input, shape index: {}]
  %s1 = inlined_call_operand.vmem [shape: bf16[8,128], index: 1, kind: input, shape index: {}]
  %s2 = inlined_call_operand.vmem [shape: f32[1,128], index: 2, kind: input, shape index: {}]
  %s3 = inlined_call_operand.hbm [shape: bf16[128,128], index: 3, kind: input, shape index: {}]
  %s4 = inlined_call_operand.vmem [shape: f32[1,128], index: 4, kind: input, shape index: {}]
  %s5 = inlined_call_operand.hbm [shape: bf16[128,128], index: 5, kind: input, shape index: {}]
  %s6 = inlined_call_operand.vmem [shape: f32[1,128], index: 6, kind: input, shape index: {}]
  %s7 = inlined_call_operand.hbm [shape: bf16[128,128], index: 7, kind: input, shape index: {}]
  %s8 = inlined_call_operand.vmem [shape: f32[1,128], index: 8, kind: input, shape index: {}]
  %s9 = inlined_call_operand.hbm [shape: f32[16,128], index: 9, kind: output, shape index: {0}]
  %s10 = inlined_call_operand.hbm [shape: f32[16,128], index: 10, kind: output, shape index: {1}]
  %11 = xla_tuple %s9, %s10
  %s12 = sld [smem:[#allocation0]]
  $region93: #{tpu_custom_call.1} parent=0
    _
  %s14 = ssub.s32 1, %s12
  %s15 = scalar_select 0, %s14, %s12
  $region1: #{tpu_custom_call.1} parent=0
    #allocation3 [shape = 'u8[32768]{0}', space=vmem, size = 0x8000, scoped, tag = 'input window, operand 3, single buffered']
    #allocation4 [shape = 's32[2]{0}', space=sflag, size = 0x8, scoped, tag = 'scoped memory for tpu_custom_call.1']
    #allocation5 [shape = 's32[2]{0}', space=sflag, size = 0x8, scoped, tag = 'scoped memory for tpu_custom_call.1']
    #allocation6 [shape = 'u8[32768]{0}', space=vmem, size = 0x8000, scoped, tag = 'input window, operand 5, single buffered']
    #allocation7 [shape = 's32[1]{0}', space=sflag, size = 0x4, scoped, tag = 'scoped memory for tpu_custom_call.1']
    #allocation8 [shape = 'u8[32768]{0}', space=vmem, size = 0x8000, scoped, tag = 'input window, operand 7, single buffered']
    #allocation9 [shape = 'u8[8192]{0}', space=vmem, size = 0x2000, scoped, tag = 'output window, operand 0']
    #allocation10 [shape = 'u8[8192]{0}', space=vmem, size = 0x2000, scoped, tag = 'output window, operand 1']
    #allocation11 [shape = 's32[2]{0}', space=sflag, size = 0x8, scoped, tag = 'scoped memory for tpu_custom_call.1']
    %16 = vsyncpa [#allocation4], 0
    %17 = vsyncpa [#allocation7], 0
    %18 = vsyncpa [#allocation5], 0
    %s19 = scalar_lea.sflag [#allocation5], 1
    %20 = vsyncpa %s19, 0
    %21 = vsyncpa [#allocation11], 0
    %s22 = scalar_lea.sflag [#allocation11], 1
    %23 = vsyncpa %s22, 0
    loop: start=0, step=1, limit=4
    $region2: #{tpu_custom_call.1} parent=1 // loop_pre_header
      _
    $region3: #{tpu_custom_call.1} parent=1 // loop_header
      %s25 = sphi 0, %s29
      %p26 = scmp.ge.s32.totalorder %s25, 4
      %s32 = sphi 0, %s44
      %s33 = sphi 0, %s40
      %s34 = sphi 0, %s32
      %s35 = sphi 0, %s33
      %s36 = sphi 0, %s34
      %s37 = sphi 0, %s35
      %s47 = sphi 0, %s49
      %s50 = sphi 0, %s47
      %s51 = sphi 0, %s50
      %s67 = sphi 0, %s51
      %s71 = sphi 0, %s71
      %s73 = sphi 0, %s71
      %s74 = sphi 0, %s73
      %s88 = sphi 0, %s74
      %s92 = sphi 0, %s92
      %s94 = sphi 0, %s92
      %s95 = sphi 0, %s94
      %s109 = sphi 0, %s95
      %s113 = sphi 0, %s113
      %s115 = sphi 0, %s113
      %s116 = sphi 0, %s115
      %s130 = sphi 0, %s116
      %s134 = sphi 0, %s134
      %s136 = sphi 0, %s134
      %s137 = sphi 0, %s136
      %s151 = sphi 0, %s137
      %s157 = sphi 0, %s159
      %s160 = sphi 0, %s157
      %s161 = sphi 0, %s160
      %s177 = sphi 0, %s161
      %s183 = sphi 0, %s185
      %s186 = sphi 0, %s183
      %s187 = sphi 0, %s186
      %s203 = sphi 0, %s187
      %s209 = sphi 0, %s211
      %s212 = sphi 0, %s209
      %s213 = sphi 0, %s212
      %s229 = sphi 0, %s213
      %s235 = sphi 0, %s237
      %s238 = sphi 0, %s235
      %s239 = sphi 0, %s238
      %s255 = sphi 0, %s239
      %s263 = sphi 0, %s265
      %s266 = sphi 0, %s263
      %s267 = sphi 0, %s266
      %s283 = sphi 0, %s267
      %s291 = sphi 0, %s293
      %s294 = sphi 0, %s291
      %s295 = sphi 0, %s294
      %s311 = sphi 0, %s295
    $region4: #{tpu_custom_call.1} parent=1 // loop_header_branch
      %28 = sbr.rel (%p26) target = $region8
    $region5: #{tpu_custom_call.1} parent=1 // loop_body
      %s30 = ssub.s32 %s25, 1
      %s31 = ssub.s32 %s25, 2
      %s38 = sadd.s32 1, %s33
      %p39 = scmp.ge.s32.totalorder %s38, 1
      %s40 = scalar_select %p39, 0, %s38
      %s41 = sadd.s32 1, %s32
      %s42 = scalar_select %p39, %s41, %s32
      %p43 = scmp.ge.s32.totalorder %s42, 2
      %s44 = scalar_select %p43, 0, %s42
      %s45 = ssub.s32 %s32, %s44
      %p46 = scmp.eq.s32.totalorder %s45, 0
      %s48 = sadd.s32 %s47, 1
      %s49 = scalar_select %p46, %s47, %s48
      %p52 = pneg %p46
      %p53 = scmp.eq.s32.totalorder %s25, 1
      %p54 = por %p52, %p53
      %p55 = scmp.ne.s32.totalorder %s47, %s50
      %p56 = scmp.eq.s32.totalorder %s25, 0
      %p57 = por %p55, %p56
      %p58 = scmp.ne.s32.totalorder %s47, %s50
      %p59 = scmp.eq.s32.totalorder %s30, 1
      %p60 = por %p58, %p59
      %p61 = scmp.ne.s32.totalorder %s50, %s51
      %p62 = scmp.eq.s32.totalorder %s30, 0
      %p63 = por %p61, %p62
      %p64 = scmp.ne.s32.totalorder %s50, %s51
      %p65 = scmp.eq.s32.totalorder %s31, 1
      %p66 = por %p64, %p65
      %p68 = scmp.ne.s32.totalorder %s51, %s67
      %p69 = scmp.eq.s32.totalorder %s31, 0
      %p70 = por %p68, %p69
      %s72 = sadd.s32 %s71, 1
      %p75 = scmp.eq.s32.totalorder %s25, 1
      %p76 = scmp.ne.s32.totalorder %s71, %s73
      %p77 = scmp.eq.s32.totalorder %s25, 0
      %p78 = por %p76, %p77
      %p79 = scmp.ne.s32.totalorder %s71, %s73
      %p80 = scmp.eq.s32.totalorder %s30, 1
      %p81 = por %p79, %p80
      %p82 = scmp.ne.s32.totalorder %s73, %s74
      %p83 = scmp.eq.s32.totalorder %s30, 0
      %p84 = por %p82, %p83
      %p85 = scmp.ne.s32.totalorder %s73, %s74
      %p86 = scmp.eq.s32.totalorder %s31, 1
      %p87 = por %p85, %p86
      %p89 = scmp.ne.s32.totalorder %s74, %s88
      %p90 = scmp.eq.s32.totalorder %s31, 0
      %p91 = por %p89, %p90
      %s93 = sadd.s32 %s92, 1
      %p96 = scmp.eq.s32.totalorder %s25, 1
      %p97 = scmp.ne.s32.totalorder %s92, %s94
      %p98 = scmp.eq.s32.totalorder %s25, 0
      %p99 = por %p97, %p98
      %p100 = scmp.ne.s32.totalorder %s92, %s94
      %p101 = scmp.eq.s32.totalorder %s30, 1
      %p102 = por %p100, %p101
      %p103 = scmp.ne.s32.totalorder %s94, %s95
      %p104 = scmp.eq.s32.totalorder %s30, 0
      %p105 = por %p103, %p104
      %p106 = scmp.ne.s32.totalorder %s94, %s95
      %p107 = scmp.eq.s32.totalorder %s31, 1
      %p108 = por %p106, %p107
      %p110 = scmp.ne.s32.totalorder %s95, %s109
      %p111 = scmp.eq.s32.totalorder %s31, 0
      %p112 = por %p110, %p111
      %s114 = sadd.s32 %s113, 1
      %p117 = scmp.eq.s32.totalorder %s25, 1
      %p118 = scmp.ne.s32.totalorder %s113, %s115
      %p119 = scmp.eq.s32.totalorder %s25, 0
      %p120 = por %p118, %p119
      %p121 = scmp.ne.s32.totalorder %s113, %s115
      %p122 = scmp.eq.s32.totalorder %s30, 1
      %p123 = por %p121, %p122
      %p124 = scmp.ne.s32.totalorder %s115, %s116
      %p125 = scmp.eq.s32.totalorder %s30, 0
      %p126 = por %p124, %p125
      %p127 = scmp.ne.s32.totalorder %s115, %s116
      %p128 = scmp.eq.s32.totalorder %s31, 1
      %p129 = por %p127, %p128
      %p131 = scmp.ne.s32.totalorder %s116, %s130
      %p132 = scmp.eq.s32.totalorder %s31, 0
      %p133 = por %p131, %p132
      %s135 = sadd.s32 %s134, 1
      %p138 = scmp.eq.s32.totalorder %s25, 1
      %p139 = scmp.ne.s32.totalorder %s134, %s136
      %p140 = scmp.eq.s32.totalorder %s25, 0
      %p141 = por %p139, %p140
      %p142 = scmp.ne.s32.totalorder %s134, %s136
      %p143 = scmp.eq.s32.totalorder %s30, 1
      %p144 = por %p142, %p143
      %p145 = scmp.ne.s32.totalorder %s136, %s137
      %p146 = scmp.eq.s32.totalorder %s30, 0
      %p147 = por %p145, %p146
      %p148 = scmp.ne.s32.totalorder %s136, %s137
      %p149 = scmp.eq.s32.totalorder %s31, 1
      %p150 = por %p148, %p149
      %p152 = scmp.ne.s32.totalorder %s137, %s151
      %p153 = scmp.eq.s32.totalorder %s31, 0
      %p154 = por %p152, %p153
      %s155 = ssub.s32 %s33, %s40
      %p156 = scmp.eq.s32.totalorder %s155, 0
      %s158 = sadd.s32 %s157, 1
      %s159 = scalar_select %p156, %s157, %s158
      %p162 = pneg %p156
      %p163 = scmp.eq.s32.totalorder %s25, 1
      %p164 = por %p162, %p163
      %p165 = scmp.ne.s32.totalorder %s157, %s160
      %p166 = scmp.eq.s32.totalorder %s25, 0
      %p167 = por %p165, %p166
      %p168 = scmp.ne.s32.totalorder %s157, %s160
      %p169 = scmp.eq.s32.totalorder %s30, 1
      %p170 = por %p168, %p169
      %p171 = scmp.ne.s32.totalorder %s160, %s161
      %p172 = scmp.eq.s32.totalorder %s30, 0
      %p173 = por %p171, %p172
      %p174 = scmp.ne.s32.totalorder %s160, %s161
      %p175 = scmp.eq.s32.totalorder %s31, 1
      %p176 = por %p174, %p175
      %p178 = scmp.ne.s32.totalorder %s161, %s177
      %p179 = scmp.eq.s32.totalorder %s31, 0
      %p180 = por %p178, %p179
      %s181 = ssub.s32 %s33, %s40
      %p182 = scmp.eq.s32.totalorder %s181, 0
      %s184 = sadd.s32 %s183, 1
      %s185 = scalar_select %p182, %s183, %s184
      %p188 = pneg %p182
      %p189 = scmp.eq.s32.totalorder %s25, 1
      %p190 = por %p188, %p189
      %p191 = scmp.ne.s32.totalorder %s183, %s186
      %p192 = scmp.eq.s32.totalorder %s25, 0
      %p193 = por %p191, %p192
      %p194 = scmp.ne.s32.totalorder %s183, %s186
      %p195 = scmp.eq.s32.totalorder %s30, 1
      %p196 = por %p194, %p195
      %p197 = scmp.ne.s32.totalorder %s186, %s187
      %p198 = scmp.eq.s32.totalorder %s30, 0
      %p199 = por %p197, %p198
      %p200 = scmp.ne.s32.totalorder %s186, %s187
      %p201 = scmp.eq.s32.totalorder %s31, 1
      %p202 = por %p200, %p201
      %p204 = scmp.ne.s32.totalorder %s187, %s203
      %p205 = scmp.eq.s32.totalorder %s31, 0
      %p206 = por %p204, %p205
      %s207 = ssub.s32 %s33, %s40
      %p208 = scmp.eq.s32.totalorder %s207, 0
      %s210 = sadd.s32 %s209, 1
      %s211 = scalar_select %p208, %s209, %s210
      %p214 = pneg %p208
      %p215 = scmp.eq.s32.totalorder %s25, 1
      %p216 = por %p214, %p215
      %p217 = scmp.ne.s32.totalorder %s209, %s212
      %p218 = scmp.eq.s32.totalorder %s25, 0
      %p219 = por %p217, %p218
      %p220 = scmp.ne.s32.totalorder %s209, %s212
      %p221 = scmp.eq.s32.totalorder %s30, 1
      %p222 = por %p220, %p221
      %p223 = scmp.ne.s32.totalorder %s212, %s213
      %p224 = scmp.eq.s32.totalorder %s30, 0
      %p225 = por %p223, %p224
      %p226 = scmp.ne.s32.totalorder %s212, %s213
      %p227 = scmp.eq.s32.totalorder %s31, 1
      %p228 = por %p226, %p227
      %p230 = scmp.ne.s32.totalorder %s213, %s229
      %p231 = scmp.eq.s32.totalorder %s31, 0
      %p232 = por %p230, %p231
      %s233 = ssub.s32 %s33, %s40
      %p234 = scmp.eq.s32.totalorder %s233, 0
      %s236 = sadd.s32 %s235, 1
      %s237 = scalar_select %p234, %s235, %s236
      %p240 = pneg %p234
      %p241 = scmp.eq.s32.totalorder %s25, 1
      %p242 = por %p240, %p241
      %p243 = scmp.ne.s32.totalorder %s235, %s238
      %p244 = scmp.eq.s32.totalorder %s25, 0
      %p245 = por %p243, %p244
      %p246 = scmp.ne.s32.totalorder %s235, %s238
      %p247 = scmp.eq.s32.totalorder %s30, 1
      %p248 = por %p246, %p247
      %p249 = scmp.ne.s32.totalorder %s238, %s239
      %p250 = scmp.eq.s32.totalorder %s30, 0
      %p251 = por %p249, %p250
      %p252 = scmp.ne.s32.totalorder %s238, %s239
      %p253 = scmp.eq.s32.totalorder %s31, 1
      %p254 = por %p252, %p253
      %p256 = scmp.ne.s32.totalorder %s239, %s255
      %p257 = scmp.eq.s32.totalorder %s31, 0
      %p258 = por %p256, %p257
      %s259 = ssub.s32 %s32, %s44
      %s260 = ssub.s32 %s33, %s40
      %s261 = sor.u32 %s259, %s260
      %p262 = scmp.eq.s32.totalorder %s261, 0
      %s264 = sadd.s32 %s263, 1
      %s265 = scalar_select %p262, %s263, %s264
      %p268 = pneg %p262
      %p269 = scmp.eq.s32.totalorder %s25, 1
      %p270 = por %p268, %p269
      %p271 = scmp.ne.s32.totalorder %s263, %s266
      %p272 = scmp.eq.s32.totalorder %s25, 0
      %p273 = por %p271, %p272
      %p274 = scmp.ne.s32.totalorder %s263, %s266
      %p275 = scmp.eq.s32.totalorder %s30, 1
      %p276 = por %p274, %p275
      %p277 = scmp.ne.s32.totalorder %s266, %s267
      %p278 = scmp.eq.s32.totalorder %s30, 0
      %p279 = por %p277, %p278
      %p280 = scmp.ne.s32.totalorder %s266, %s267
      %p281 = scmp.eq.s32.totalorder %s31, 1
      %p282 = por %p280, %p281
      %p284 = scmp.ne.s32.totalorder %s267, %s283
      %p285 = scmp.eq.s32.totalorder %s31, 0
      %p286 = por %p284, %p285
      %s287 = ssub.s32 %s32, %s44
      %s288 = ssub.s32 %s33, %s40
      %s289 = sor.u32 %s287, %s288
      %p290 = scmp.eq.s32.totalorder %s289, 0
      %s292 = sadd.s32 %s291, 1
      %s293 = scalar_select %p290, %s291, %s292
      %p296 = pneg %p290
      %p297 = scmp.eq.s32.totalorder %s25, 1
      %p298 = por %p296, %p297
      %p299 = scmp.ne.s32.totalorder %s291, %s294
      %p300 = scmp.eq.s32.totalorder %s25, 0
      %p301 = por %p299, %p300
      %p302 = scmp.ne.s32.totalorder %s291, %s294
      %p303 = scmp.eq.s32.totalorder %s30, 1
      %p304 = por %p302, %p303
      %p305 = scmp.ne.s32.totalorder %s294, %s295
      %p306 = scmp.eq.s32.totalorder %s30, 0
      %p307 = por %p305, %p306
      %p308 = scmp.ne.s32.totalorder %s294, %s295
      %p309 = scmp.eq.s32.totalorder %s31, 1
      %p310 = por %p308, %p309
      %p312 = scmp.ne.s32.totalorder %s295, %s311
      %p313 = scmp.eq.s32.totalorder %s31, 0
      %p314 = por %p312, %p313
      %p315 = scmp.le.s32.totalorder 1, %s25
      %p316 = scmp.lt.s32.totalorder %s25, 3
      %p317 = pnand %p315, %p316
      %p318 = pneg %p317
      // Predicated region
      $region9: #{tpu_custom_call.1} parent=5 // pred_check
        _
      $region10: #{tpu_custom_call.1} parent=5 // pred_check_branch
        %320 = sbr.rel (%p317) target = $region12
      $region11: #{tpu_custom_call.1} parent=5 // pred_region
        %s321 = ssub.s32 %s25, 1
        // Predicated region
        $region13: #{tpu_custom_call.1} parent=11 // pred_check
          %p322 = pneg %p84
        $region14: #{tpu_custom_call.1} parent=11 // pred_check_branch
          %324 = sbr.rel (%p322) target = $region16
        $region15: #{tpu_custom_call.1} parent=11 // pred_region
          _
        $region16: #{tpu_custom_call.1} parent=11 // pred_fallthru
          _
        // Predicated region
        $region17: #{tpu_custom_call.1} parent=11 // pred_check
          %p325 = pneg %p105
        $region18: #{tpu_custom_call.1} parent=11 // pred_check_branch
          %327 = sbr.rel (%p325) target = $region20
        $region19: #{tpu_custom_call.1} parent=11 // pred_region
          _
        $region20: #{tpu_custom_call.1} parent=11 // pred_fallthru
          _
        // Predicated region
        $region21: #{tpu_custom_call.1} parent=11 // pred_check
          %p328 = pneg %p126
        $region22: #{tpu_custom_call.1} parent=11 // pred_check_branch
          %330 = sbr.rel (%p328) target = $region24
        $region23: #{tpu_custom_call.1} parent=11 // pred_region
          %332 = vsyncadd [#allocation4], 0
          %s333 = sshll.u32 %s3, 4
          %s334 = int_to_ptr.hbm [resolvable:$true] %s333
          %s335 = sshll.u32 [#allocation3], 4
          %s336 = int_to_ptr.vmem [resolvable:$true] %s335
          %341 = dma.hbm_to_vmem [thread:$0]  %s334, 1024, %s336, [#allocation4], 64, 64, 4
        $region24: #{tpu_custom_call.1} parent=11 // pred_fallthru
          _
        // Predicated region
        $region25: #{tpu_custom_call.1} parent=11 // pred_check
          %p342 = pneg %p147
        $region26: #{tpu_custom_call.1} parent=11 // pred_check_branch
          %344 = sbr.rel (%p342) target = $region28
        $region27: #{tpu_custom_call.1} parent=11 // pred_region
          _
        $region28: #{tpu_custom_call.1} parent=11 // pred_fallthru
          _
        // Predicated region
        $region29: #{tpu_custom_call.1} parent=11 // pred_check
          %p345 = pneg %p173
        $region30: #{tpu_custom_call.1} parent=11 // pred_check_branch
          %347 = sbr.rel (%p345) target = $region32
        $region31: #{tpu_custom_call.1} parent=11 // pred_region
          %349 = vsyncadd [#allocation7], 0
          %s350 = smul.addr %s35, 4
          %s351 = scalar_lea.hbm %s5, %s350
          %s352 = sshll.u32 %s351, 4
          %s353 = int_to_ptr.hbm [resolvable:$true] %s352
          %s354 = sshll.u32 [#allocation6], 4
          %s355 = int_to_ptr.vmem [resolvable:$true] %s354
          %360 = dma.hbm_to_vmem [thread:$0]  %s353, 1024, %s355, [#allocation7], 64, 64, 4
        $region32: #{tpu_custom_call.1} parent=11 // pred_fallthru
          _
        // Predicated region
        $region33: #{tpu_custom_call.1} parent=11 // pred_check
          %p361 = pneg %p199
        $region34: #{tpu_custom_call.1} parent=11 // pred_check_branch
          %363 = sbr.rel (%p361) target = $region36
        $region35: #{tpu_custom_call.1} parent=11 // pred_region
          %p364 = scmp.lt.s32.totalorder %s35, 0
          %s365 = scalar_select %p364, %s35, 0
          %s366 = scalar_lea.vmem %s6, %s365
        $region36: #{tpu_custom_call.1} parent=11 // pred_fallthru
          _
        // Predicated region
        $region37: #{tpu_custom_call.1} parent=11 // pred_check
          %p367 = pneg %p225
        $region38: #{tpu_custom_call.1} parent=11 // pred_check_branch
          %369 = sbr.rel (%p367) target = $region40
        $region39: #{tpu_custom_call.1} parent=11 // pred_region
          %371 = vsyncadd [#allocation7], 0
          %s372 = smul.addr %s35, 4
          %s373 = scalar_lea.hbm %s7, %s372
          %s374 = sshll.u32 %s373, 4
          %s375 = int_to_ptr.hbm [resolvable:$true] %s374
          %s376 = sshll.u32 [#allocation8], 4
          %s377 = int_to_ptr.vmem [resolvable:$true] %s376
          %382 = dma.hbm_to_vmem [thread:$0]  %s375, 1024, %s377, [#allocation7], 64, 64, 4
        $region40: #{tpu_custom_call.1} parent=11 // pred_fallthru
          _
        // Predicated region
        $region41: #{tpu_custom_call.1} parent=11 // pred_check
          %p383 = pneg %p251
        $region42: #{tpu_custom_call.1} parent=11 // pred_check_branch
          %385 = sbr.rel (%p383) target = $region44
        $region43: #{tpu_custom_call.1} parent=11 // pred_region
          %p386 = scmp.lt.s32.totalorder %s35, 0
          %s387 = scalar_select %p386, %s35, 0
          %s388 = scalar_lea.vmem %s8, %s387
        $region44: #{tpu_custom_call.1} parent=11 // pred_fallthru
          _
      $region12: #{tpu_custom_call.1} parent=5 // pred_fallthru
        _
      %p389 = scmp.lt.s32.totalorder %s25, 2
      // Predicated region
      $region45: #{tpu_custom_call.1} parent=5 // pred_check
        %p390 = pneg %p389
      $region46: #{tpu_custom_call.1} parent=5 // pred_check_branch
        %392 = sbr.rel (%p390) target = $region48
      $region47: #{tpu_custom_call.1} parent=5 // pred_region
        // Predicated region
        $region49: #{tpu_custom_call.1} parent=47 // pred_check
          %p393 = pneg %p57
        $region50: #{tpu_custom_call.1} parent=47 // pred_check_branch
          %395 = sbr.rel (%p393) target = $region52
        $region51: #{tpu_custom_call.1} parent=47 // pred_region
          %p396 = scmp.lt.s32.totalorder %s32, 1
          %s397 = scalar_select %p396, %s32, 1
          %s398 = smul.addr %s397, 4
          %s399 = scalar_lea.vmem %s0, %s398
        $region52: #{tpu_custom_call.1} parent=47 // pred_fallthru
          _
      $region48: #{tpu_custom_call.1} parent=5 // pred_fallthru
        _
      %p400 = scmp.le.s32.totalorder 1, %s25
      %p401 = scmp.lt.s32.totalorder %s25, 3
      %p402 = pnand %p400, %p401
      %p403 = pneg %p402
      // Predicated region
      $region53: #{tpu_custom_call.1} parent=5 // pred_check
        _
      $region54: #{tpu_custom_call.1} parent=5 // pred_check_branch
        %405 = sbr.rel (%p402) target = $region56
      $region55: #{tpu_custom_call.1} parent=5 // pred_region
        %s406 = ssub.s32 %s25, 1
        // Predicated region
        $region57: #{tpu_custom_call.1} parent=55 // pred_check
          %p407 = pneg %p126
        $region58: #{tpu_custom_call.1} parent=55 // pred_check_branch
          %409 = sbr.rel (%p407) target = $region60
        $region59: #{tpu_custom_call.1} parent=55 // pred_region
          %411 = dma.done [#allocation4], 1024
        $region60: #{tpu_custom_call.1} parent=55 // pred_fallthru
          _
        // Predicated region
        $region61: #{tpu_custom_call.1} parent=55 // pred_check
          %p412 = pneg %p173
        $region62: #{tpu_custom_call.1} parent=55 // pred_check_branch
          %414 = sbr.rel (%p412) target = $region64
        $region63: #{tpu_custom_call.1} parent=55 // pred_region
          %416 = dma.done [#allocation7], 1024
        $region64: #{tpu_custom_call.1} parent=55 // pred_fallthru
          _
        // Predicated region
        $region65: #{tpu_custom_call.1} parent=55 // pred_check
          %p417 = pneg %p225
        $region66: #{tpu_custom_call.1} parent=55 // pred_check_branch
          %419 = sbr.rel (%p417) target = $region68
        $region67: #{tpu_custom_call.1} parent=55 // pred_region
          %421 = dma.done [#allocation7], 1024
        $region68: #{tpu_custom_call.1} parent=55 // pred_fallthru
          _
        %p422 = scmp.lt.s32.totalorder %s34, 1
        %s423 = scalar_select %p422, %s34, 1
        %s424 = smul.addr %s423, 4
        %s425 = scalar_lea.vmem %s0, %s424
        %p426 = pneg %p63
        %p427 = pneg %p60
        %p428 = pneg %p84
        %p429 = pneg %p81
        %p430 = pneg %p105
        %p431 = pneg %p102
        %p432 = pneg %p126
        %p433 = pneg %p123
        %p434 = pneg %p147
        %p435 = pneg %p144
        %p436 = pneg %p173
        %p437 = pneg %p170
        %p438 = scmp.lt.s32.totalorder %s35, 0
        %s439 = scalar_select %p438, %s35, 0
        %s440 = scalar_lea.vmem %s6, %s439
        %p441 = pneg %p199
        %p442 = pneg %p196
        %p443 = pneg %p225
        %p444 = pneg %p222
        %p445 = scmp.lt.s32.totalorder %s35, 0
        %s446 = scalar_select %p445, %s35, 0
        %s447 = scalar_lea.vmem %s8, %s446
        %p448 = pneg %p251
        %p449 = pneg %p248
        %p450 = pneg %p279
        %p451 = pneg %p276
        %s452 = sand.u32 %s266, 1
        %s453 = scalar_lea.sflag [#allocation5], %s452
        %s454 = sand.u32 %s266, 1
        %s455 = smul.addr %s454, 8
        %s456 = scalar_lea.vmem [#allocation9], %s455
        %p457 = pneg %p307
        %p458 = pneg %p304
        %s459 = sand.u32 %s294, 1
        %s460 = scalar_lea.sflag [#allocation11], %s459
        %s461 = sand.u32 %s294, 1
        %s462 = smul.addr %s461, 8
        %s463 = scalar_lea.vmem [#allocation10], %s462
        %p464 = scmp.lt.s32.totalorder %s34, 1
        %s465 = scalar_select %p464, %s34, 1
        %s466 = smul.addr %s465, 4
        %s467 = scalar_lea.vmem %s0, %s466
        %p468 = scmp.lt.s32.totalorder %s35, 0
        %s469 = scalar_select %p468, %s35, 0
        %s470 = scalar_lea.vmem %s6, %s469
        %p471 = scmp.lt.s32.totalorder %s35, 0
        %s472 = scalar_select %p471, %s35, 0
        %s473 = scalar_lea.vmem %s8, %s472
        %p475 = scmp.eq.s32.totalorder %s35, 0
        // Predicated region
        $region69: #{tpu_custom_call.1} parent=55 // pred_check
          %p476 = pneg %p475
        $region70: #{tpu_custom_call.1} parent=55 // pred_check_branch
          %478 = sbr.rel (%p476) target = $region72
        $region71: #{tpu_custom_call.1} parent=55 // pred_region
          %v479 = vld [vmem:[%s467] sm:$0xf]
          %v480 = vld [vmem:[%s1] sm:$0xf]
          %v481 = vld [vmem:[%s2] sm:$0x1]
          %v483 = vperm.slane %v481, 0
          %vm485 = vcmask 64512
          %v487 = vsel %vm485, %v479, 0
          %vm489 = vcmask 1043456
          %v491 = vsel %vm489, %v480, 0
          %493 = vmatpush.bf16.msra.mxu0 0
          %494 = vmatpush.bf16.msra.mxu0 0
          %495 = vmatpush.bf16.msra.mxu0 0
          %496 = vmatpush.bf16.msra.mxu0 0
          %497 = vmatpush.bf16.msra.mxu0 0
          %498 = vmatpush.bf16.msra.mxu0 0
          %499 = vmatpush.bf16.msra.mxu0 0
          %500 = vmatpush.bf16.msra.mxu0 %v491
          %501 = vmatmul.bf16.gmra.mxu0 %v487
          %v502 = vpop.f32.mrf.mxu0
          %v503 = vadd.f32 %v483, %v502
          %v504 = vpop.f32.mrf.mxu0
          %505 = vdwg.mxu0
          %v506 = vmax.f32 %v503, 0.0
          %v507 = vpack.c.bf16 %v506, %v506
          %v508 = vld [vmem:[#allocation3] sm:$0xf]
          %v509 = vld [vmem:[#allocation3 + $0x4] sm:$0xf]
          %v510 = vld [vmem:[#allocation3 + $0x8] sm:$0xf]
          %v511 = vld [vmem:[#allocation3 + $0xc] sm:$0xf]
          %v512 = vld [vmem:[#allocation3 + $0x10] sm:$0xf]
          %v513 = vld [vmem:[#allocation3 + $0x14] sm:$0xf]
          %v514 = vld [vmem:[#allocation3 + $0x18] sm:$0xf]
          %v515 = vld [vmem:[#allocation3 + $0x1c] sm:$0xf]
          %v516 = vld [vmem:[#allocation3 + $0x20] sm:$0xf]
          %v517 = vld [vmem:[#allocation3 + $0x24] sm:$0xf]
          %v518 = vld [vmem:[#allocation3 + $0x28] sm:$0xf]
          %v519 = vld [vmem:[#allocation3 + $0x2c] sm:$0xf]
          %v520 = vld [vmem:[#allocation3 + $0x30] sm:$0xf]
          %v521 = vld [vmem:[#allocation3 + $0x34] sm:$0xf]
          %v522 = vld [vmem:[#allocation3 + $0x38] sm:$0xf]
          %v523 = vld [vmem:[#allocation3 + $0x3c] sm:$0xf]
          %v524 = vld [vmem:[%s4] sm:$0x1]
          %v526 = vperm.slane %v524, 0
          %v544 = vunpack.c.l.b16 %v508
          %v545 = vunpack.c.l.b16 %v509
          %v546 = vunpack.c.l.b16 %v510
          %v547 = vunpack.c.l.b16 %v511
          %v548 = vunpack.c.l.b16 %v512
          %v549 = vunpack.c.l.b16 %v513
          %v550 = vunpack.c.l.b16 %v514
          %v551 = vunpack.c.l.b16 %v515
          %v552 = vunpack.c.l.b16 %v516
          %v553 = vunpack.c.l.b16 %v517
          %v554 = vunpack.c.l.b16 %v518
          %v555 = vunpack.c.l.b16 %v519
          %v556 = vunpack.c.l.b16 %v520
          %v557 = vunpack.c.l.b16 %v521
          %v558 = vunpack.c.l.b16 %v522
          %v559 = vunpack.c.l.b16 %v523
          %v560 = vpack.c.b16 %v545, %v544
          %v561 = vpack.c.b16 %v547, %v546
          %v562 = vpack.c.b16 %v549, %v548
          %v563 = vpack.c.b16 %v551, %v550
          %v564 = vpack.c.b16 %v553, %v552
          %v565 = vpack.c.b16 %v555, %v554
          %v566 = vpack.c.b16 %v557, %v556
          %v567 = vpack.c.b16 %v559, %v558
          %576 = vmatpush.bf16.msra.mxu0 %v567
          %577 = vmatpush.bf16.msra.mxu0 %v566
          %578 = vmatpush.bf16.msra.mxu0 %v565
          %579 = vmatpush.bf16.msra.mxu0 %v564
          %580 = vmatpush.bf16.msra.mxu0 %v563
          %581 = vmatpush.bf16.msra.mxu0 %v562
          %582 = vmatpush.bf16.msra.mxu0 %v561
          %583 = vmatpush.bf16.msra.mxu0 %v560
          %584 = vmatmul.bf16.gmra.mxu0 %v507
          %v585 = vpop.f32.mrf.mxu0
          %v586 = vadd.f32 %v526, %v585
          %v587 = vpop.f32.mrf.mxu0
          %588 = vdwg.mxu0
          %v589 = vmax.f32 %v586, 0.0
          %v590 = vpack.c.bf16 %v589, %v589
          %591 = vst [vmem:[#allocation2] sm:$0xf] %v590
        $region72: #{tpu_custom_call.1} parent=55 // pred_fallthru
          _
        %v592 = vld [vmem:[#allocation2] sm:$0xf]
        %v593 = vld [vmem:[#allocation6] sm:$0xf]
        %v594 = vld [vmem:[#allocation6 + $0x4] sm:$0xf]
        %v595 = vld [vmem:[#allocation6 + $0x8] sm:$0xf]
        %v596 = vld [vmem:[#allocation6 + $0xc] sm:$0xf]
        %v597 = vld [vmem:[#allocation6 + $0x10] sm:$0xf]
        %v598 = vld [vmem:[#allocation6 + $0x14] sm:$0xf]
        %v599 = vld [vmem:[#allocation6 + $0x18] sm:$0xf]
        %v600 = vld [vmem:[#allocation6 + $0x1c] sm:$0xf]
        %v601 = vld [vmem:[#allocation6 + $0x20] sm:$0xf]
        %v602 = vld [vmem:[#allocation6 + $0x24] sm:$0xf]
        %v603 = vld [vmem:[#allocation6 + $0x28] sm:$0xf]
        %v604 = vld [vmem:[#allocation6 + $0x2c] sm:$0xf]
        %v605 = vld [vmem:[#allocation6 + $0x30] sm:$0xf]
        %v606 = vld [vmem:[#allocation6 + $0x34] sm:$0xf]
        %v607 = vld [vmem:[#allocation6 + $0x38] sm:$0xf]
        %v608 = vld [vmem:[#allocation6 + $0x3c] sm:$0xf]
        %v609 = vld [vmem:[%s470] sm:$0x1]
        %v611 = vperm.slane %v609, 0
        %v629 = vunpack.c.l.b16 %v593
        %v630 = vunpack.c.l.b16 %v594
        %v631 = vunpack.c.l.b16 %v595
        %v632 = vunpack.c.l.b16 %v596
        %v633 = vunpack.c.l.b16 %v597
        %v634 = vunpack.c.l.b16 %v598
        %v635 = vunpack.c.l.b16 %v599
        %v636 = vunpack.c.l.b16 %v600
        %v637 = vunpack.c.l.b16 %v601
        %v638 = vunpack.c.l.b16 %v602
        %v639 = vunpack.c.l.b16 %v603
        %v640 = vunpack.c.l.b16 %v604
        %v641 = vunpack.c.l.b16 %v605
        %v642 = vunpack.c.l.b16 %v606
        %v643 = vunpack.c.l.b16 %v607
        %v644 = vunpack.c.l.b16 %v608
        %v645 = vpack.c.b16 %v630, %v629
        %v646 = vpack.c.b16 %v632, %v631
        %v647 = vpack.c.b16 %v634, %v633
        %v648 = vpack.c.b16 %v636, %v635
        %v649 = vpack.c.b16 %v638, %v637
        %v650 = vpack.c.b16 %v640, %v639
        %v651 = vpack.c.b16 %v642, %v641
        %v652 = vpack.c.b16 %v644, %v643
        %661 = vmatpush.bf16.msra.mxu0 %v652
        %662 = vmatpush.bf16.msra.mxu0 %v651
        %663 = vmatpush.bf16.msra.mxu0 %v650
        %664 = vmatpush.bf16.msra.mxu0 %v649
        %665 = vmatpush.bf16.msra.mxu0 %v648
        %666 = vmatpush.bf16.msra.mxu0 %v647
        %667 = vmatpush.bf16.msra.mxu0 %v646
        %668 = vmatpush.bf16.msra.mxu0 %v645
        %669 = vmatmul.bf16.gmra.mxu0 %v592
        %v670 = vpop.f32.mrf.mxu0
        %v671 = vadd.f32 %v611, %v670
        %v672 = vpop.f32.mrf.mxu0
        %673 = vdwg.mxu0
        %v674 = vld [vmem:[#allocation8] sm:$0xf]
        %v675 = vld [vmem:[#allocation8 + $0x4] sm:$0xf]
        %v676 = vld [vmem:[#allocation8 + $0x8] sm:$0xf]
        %v677 = vld [vmem:[#allocation8 + $0xc] sm:$0xf]
        %v678 = vld [vmem:[#allocation8 + $0x10] sm:$0xf]
        %v679 = vld [vmem:[#allocation8 + $0x14] sm:$0xf]
        %v680 = vld [vmem:[#allocation8 + $0x18] sm:$0xf]
        %v681 = vld [vmem:[#allocation8 + $0x1c] sm:$0xf]
        %v682 = vld [vmem:[#allocation8 + $0x20] sm:$0xf]
        %v683 = vld [vmem:[#allocation8 + $0x24] sm:$0xf]
        %v684 = vld [vmem:[#allocation8 + $0x28] sm:$0xf]
        %v685 = vld [vmem:[#allocation8 + $0x2c] sm:$0xf]
        %v686 = vld [vmem:[#allocation8 + $0x30] sm:$0xf]
        %v687 = vld [vmem:[#allocation8 + $0x34] sm:$0xf]
        %v688 = vld [vmem:[#allocation8 + $0x38] sm:$0xf]
        %v689 = vld [vmem:[#allocation8 + $0x3c] sm:$0xf]
        %v690 = vld [vmem:[%s473] sm:$0x1]
        %v692 = vperm.slane %v690, 0
        %v710 = vunpack.c.l.b16 %v674
        %v711 = vunpack.c.l.b16 %v675
        %v712 = vunpack.c.l.b16 %v676
        %v713 = vunpack.c.l.b16 %v677
        %v714 = vunpack.c.l.b16 %v678
        %v715 = vunpack.c.l.b16 %v679
        %v716 = vunpack.c.l.b16 %v680
        %v717 = vunpack.c.l.b16 %v681
        %v718 = vunpack.c.l.b16 %v682
        %v719 = vunpack.c.l.b16 %v683
        %v720 = vunpack.c.l.b16 %v684
        %v721 = vunpack.c.l.b16 %v685
        %v722 = vunpack.c.l.b16 %v686
        %v723 = vunpack.c.l.b16 %v687
        %v724 = vunpack.c.l.b16 %v688
        %v725 = vunpack.c.l.b16 %v689
        %v726 = vpack.c.b16 %v711, %v710
        %v727 = vpack.c.b16 %v713, %v712
        %v728 = vpack.c.b16 %v715, %v714
        %v729 = vpack.c.b16 %v717, %v716
        %v730 = vpack.c.b16 %v719, %v718
        %v731 = vpack.c.b16 %v721, %v720
        %v732 = vpack.c.b16 %v723, %v722
        %v733 = vpack.c.b16 %v725, %v724
        %742 = vmatpush.bf16.msra.mxu0 %v733
        %743 = vmatpush.bf16.msra.mxu0 %v732
        %744 = vmatpush.bf16.msra.mxu0 %v731
        %745 = vmatpush.bf16.msra.mxu0 %v730
        %746 = vmatpush.bf16.msra.mxu0 %v729
        %747 = vmatpush.bf16.msra.mxu0 %v728
        %748 = vmatpush.bf16.msra.mxu0 %v727
        %749 = vmatpush.bf16.msra.mxu0 %v726
        %750 = vmatmul.bf16.gmra.mxu0 %v592
        %v751 = vpop.f32.mrf.mxu0
        %v752 = vadd.f32 %v692, %v751
        %v753 = vpop.f32.mrf.mxu0
        %754 = vdwg.mxu0
        %v755 = vmul.f32 %v671, 1.442695
        %v756 = vpow.pop %v755
        %v757 = vmax.f32 %v756, 1e-05
        %v758 = vmin.f32 %v757, 1000000.0
        %759 = vst [vmem:[%s456] sm:$0xff] %v758
        %v760 = vmax.f32 %v752, 0.0
        %v761 = vand.u32 2147483647, %v752
        %v762 = vsub.f32 0.0, %v761
        %v763 = vmul.f32 %v762, 1.442695
        %v764 = vpow.pop %v763
        %v765 = vadd.f32 %v764, 1.0
        %v766 = vlog2.pop %v765
        %v767 = vmul.f32 %v766, 0.6931472
        %v768 = vmul.f32 -0.5, %v764
        %v769 = vadd.f32 %v768, 1.0
        %v770 = vmul.f32 %v769, %v764
        %v771 = vand.u32 2147483647, %v764
        %vm772 = vcmp.lt.f32.partialorder %v771, 0.0004427343
        %v773 = vsel %vm772, %v770, %v767
        %v774 = vadd.f32 %v760, %v773
        %v775 = vmax.f32 %v774, 0.0001
        %v776 = vmin.f32 %v775, 10000.0
        %777 = vst [vmem:[%s463] sm:$0xff] %v776
        %s778 = sand.u32 %s266, 1
        %s779 = scalar_lea.sflag [#allocation5], %s778
        %s780 = sand.u32 %s266, 1
        %s781 = smul.addr %s780, 8
        %s782 = scalar_lea.vmem [#allocation9], %s781
        %s783 = sand.u32 %s294, 1
        %s784 = scalar_lea.sflag [#allocation11], %s783
        %s785 = sand.u32 %s294, 1
        %s786 = smul.addr %s785, 8
        %s787 = scalar_lea.vmem [#allocation10], %s786
        // Predicated region
        $region73: #{tpu_custom_call.1} parent=55 // pred_check
          %p788 = pneg %p276
        $region74: #{tpu_custom_call.1} parent=55 // pred_check_branch
          %790 = sbr.rel (%p788) target = $region76
        $region75: #{tpu_custom_call.1} parent=55 // pred_region
          %792 = vsyncadd %s779, 0
          %s793 = sadd.s32 %s35, %s34
          %s794 = smul.addr %s793, 8
          %s795 = scalar_lea.hbm %s9, %s794
          %s797 = sshll.u32 %s782, 4
          %s798 = int_to_ptr.vmem [resolvable:$true] %s797
          %s799 = sshll.u32 %s795, 4
          %s800 = int_to_ptr.hbm [resolvable:$true] %s799
          %802 = dma.vmem_to_hbm [thread:$0]  %s798, 128, %s800, %s779
        $region76: #{tpu_custom_call.1} parent=55 // pred_fallthru
          _
        // Predicated region
        $region77: #{tpu_custom_call.1} parent=55 // pred_check
          %p803 = pneg %p304
        $region78: #{tpu_custom_call.1} parent=55 // pred_check_branch
          %805 = sbr.rel (%p803) target = $region80
        $region79: #{tpu_custom_call.1} parent=55 // pred_region
          %807 = vsyncadd %s784, 0
          %s808 = sadd.s32 %s35, %s34
          %s809 = smul.addr %s808, 8
          %s810 = scalar_lea.hbm %s10, %s809
          %s812 = sshll.u32 %s787, 4
          %s813 = int_to_ptr.vmem [resolvable:$true] %s812
          %s814 = sshll.u32 %s810, 4
          %s815 = int_to_ptr.hbm [resolvable:$true] %s814
          %817 = dma.vmem_to_hbm [thread:$0]  %s813, 128, %s815, %s784
        $region80: #{tpu_custom_call.1} parent=55 // pred_fallthru
          _
      $region56: #{tpu_custom_call.1} parent=5 // pred_fallthru
        _
      %p818 = scmp.le.s32.totalorder 2, %s25
      // Predicated region
      $region81: #{tpu_custom_call.1} parent=5 // pred_check
        %p819 = pneg %p818
      $region82: #{tpu_custom_call.1} parent=5 // pred_check_branch
        %821 = sbr.rel (%p819) target = $region84
      $region83: #{tpu_custom_call.1} parent=5 // pred_region
        %s822 = ssub.s32 %s25, 2
        // Predicated region
        $region85: #{tpu_custom_call.1} parent=83 // pred_check
          %p823 = pneg %p282
        $region86: #{tpu_custom_call.1} parent=83 // pred_check_branch
          %825 = sbr.rel (%p823) target = $region88
        $region87: #{tpu_custom_call.1} parent=83 // pred_region
          %s826 = sand.u32 %s267, 1
          %s827 = scalar_lea.sflag [#allocation5], %s826
          %s828 = sand.u32 %s267, 1
          %s829 = smul.addr %s828, 8
          %s830 = scalar_lea.vmem [#allocation9], %s829
          %832 = dma.done %s827, 128
        $region88: #{tpu_custom_call.1} parent=83 // pred_fallthru
          _
        // Predicated region
        $region89: #{tpu_custom_call.1} parent=83 // pred_check
          %p833 = pneg %p310
        $region90: #{tpu_custom_call.1} parent=83 // pred_check_branch
          %835 = sbr.rel (%p833) target = $region92
        $region91: #{tpu_custom_call.1} parent=83 // pred_region
          %s836 = sand.u32 %s295, 1
          %s837 = scalar_lea.sflag [#allocation11], %s836
          %s838 = sand.u32 %s295, 1
          %s839 = smul.addr %s838, 8
          %s840 = scalar_lea.vmem [#allocation10], %s839
          %842 = dma.done %s837, 128
        $region92: #{tpu_custom_call.1} parent=83 // pred_fallthru
          _
      $region84: #{tpu_custom_call.1} parent=5 // pred_fallthru
        _
    $region6: #{tpu_custom_call.1} parent=1 // loop_footer
      %s29 = sadd.s32 1, %s25
    $region7: #{tpu_custom_call.1} parent=1 // loop_footer_branch
      %24 = sbr.rel target = $region3
    $region8: #{tpu_custom_call.1} parent=1 // loop_exit
      _
    %843 = vsyncpa [#allocation4], 1
    %s844 = scalar_lea.sflag [#allocation4], 1
    %845 = vsyncpa %s844, 1
    %846 = vsyncpa [#allocation7], 1
    %847 = vsyncpa [#allocation5], 1
    %s848 = scalar_lea.sflag [#allocation5], 1
    %849 = vsyncpa %s848, 1
    %850 = vsyncpa [#allocation11], 1
    %s851 = scalar_lea.sflag [#allocation11], 1
    %852 = vsyncpa %s851, 1

// kernel: tpu_custom_call.1
$region0: #{tpu_custom_call.1}
  #allocation0 [shape = 'u32[]', space=smem, size = 0x4, offset = 0x4, fixed_abs, tag = 'smem constant byte address 0x4 - core index']
  #allocation1 [shape = 'u32[72,128]{1,0:T(1,128)}', space=vmem, size = 0x9000, scoped, tag = 'internal scratch']
  #allocation2 [shape = 'bf16[8,128]{1,0:T(8,128)(2,1)}', space=vmem, size = 0x800, scoped, tag = 'scratch operand']
  %s0 = inlined_call_operand.vmem [shape: bf16[16,8], index: 0, kind: input, shape index: {}]
  %s1 = inlined_call_operand.vmem [shape: bf16[8,128], index: 1, kind: input, shape index: {}]
  %s2 = inlined_call_operand.vmem [shape: f32[1,128], index: 2, kind: input, shape index: {}]
  %s3 = inlined_call_operand.hbm [shape: bf16[128,128], index: 3, kind: input, shape index: {}]
  %s4 = inlined_call_operand.vmem [shape: f32[1,128], index: 4, kind: input, shape index: {}]
  %s5 = inlined_call_operand.hbm [shape: bf16[128,128], index: 5, kind: input, shape index: {}]
  %s6 = inlined_call_operand.vmem [shape: f32[1,128], index: 6, kind: input, shape index: {}]
  %s7 = inlined_call_operand.hbm [shape: bf16[128,128], index: 7, kind: input, shape index: {}]
  %s8 = inlined_call_operand.vmem [shape: f32[1,128], index: 8, kind: input, shape index: {}]
  %s9 = inlined_call_operand.hbm [shape: f32[16,128], index: 9, kind: output, shape index: {0}]
  %s10 = inlined_call_operand.hbm [shape: f32[16,128], index: 10, kind: output, shape index: {1}]
  %11 = xla_tuple %s9, %s10
  %s12 = sld [smem:[#allocation0]]
  $region93: #{tpu_custom_call.1} parent=0
    _
  %s14 = ssub.s32 1, %s12
  %s15 = scalar_select 0, %s14, %s12
  $region1: #{tpu_custom_call.1} parent=0
    #allocation3 [shape = 'u8[32768]{0}', space=vmem, size = 0x8000, scoped, tag = 'input window, operand 3, single buffered']
    #allocation4 [shape = 's32[2]{0}', space=sflag, size = 0x8, scoped, tag = 'scoped memory for tpu_custom_call.1']
    #allocation5 [shape = 's32[2]{0}', space=sflag, size = 0x8, scoped, tag = 'scoped memory for tpu_custom_call.1']
    #allocation6 [shape = 'u8[32768]{0}', space=vmem, size = 0x8000, scoped, tag = 'input window, operand 5, single buffered']
    #allocation7 [shape = 's32[1]{0}', space=sflag, size = 0x4, scoped, tag = 'scoped memory for tpu_custom_call.1']
    #allocation8 [shape = 'u8[32768]{0}', space=vmem, size = 0x8000, scoped, tag = 'input window, operand 7, single buffered']
    #allocation9 [shape = 'u8[8192]{0}', space=vmem, size = 0x2000, scoped, tag = 'output window, operand 0']
    #allocation10 [shape = 'u8[8192]{0}', space=vmem, size = 0x2000, scoped, tag = 'output window, operand 1']
    #allocation11 [shape = 's32[2]{0}', space=sflag, size = 0x8, scoped, tag = 'scoped memory for tpu_custom_call.1']
    %16 = vsyncpa [#allocation4], 0
    %17 = vsyncpa [#allocation7], 0
    %18 = vsyncpa [#allocation5], 0
    %s19 = scalar_lea.sflag [#allocation5], 1
    %20 = vsyncpa %s19, 0
    %21 = vsyncpa [#allocation11], 0
    %s22 = scalar_lea.sflag [#allocation11], 1
    %23 = vsyncpa %s22, 0
    loop: start=0, step=1, limit=4
    $region2: #{tpu_custom_call.1} parent=1 // loop_pre_header
      _
    $region3: #{tpu_custom_call.1} parent=1 // loop_header
      %s25 = sphi 0, %s29
      %p26 = scmp.ge.s32.totalorder %s25, 4
      %s32 = sphi 0, %s44
      %s33 = sphi 0, %s40
      %s34 = sphi 0, %s32
      %s35 = sphi 0, %s33
      %s36 = sphi 0, %s34
      %s37 = sphi 0, %s35
      %s47 = sphi 0, %s49
      %s50 = sphi 0, %s47
      %s51 = sphi 0, %s50
      %s67 = sphi 0, %s51
      %s71 = sphi 0, %s71
      %s73 = sphi 0, %s71
      %s74 = sphi 0, %s73
      %s88 = sphi 0, %s74
      %s92 = sphi 0, %s92
      %s94 = sphi 0, %s92
      %s95 = sphi 0, %s94
      %s109 = sphi 0, %s95
      %s113 = sphi 0, %s113
      %s115 = sphi 0, %s113
      %s116 = sphi 0, %s115
      %s130 = sphi 0, %s116
      %s134 = sphi 0, %s134
      %s136 = sphi 0, %s134
      %s137 = sphi 0, %s136
      %s151 = sphi 0, %s137
      %s157 = sphi 0, %s159
      %s160 = sphi 0, %s157
      %s161 = sphi 0, %s160
      %s177 = sphi 0, %s161
      %s183 = sphi 0, %s185
      %s186 = sphi 0, %s183
      %s187 = sphi 0, %s186
      %s203 = sphi 0, %s187
      %s209 = sphi 0, %s211
      %s212 = sphi 0, %s209
      %s213 = sphi 0, %s212
      %s229 = sphi 0, %s213
      %s235 = sphi 0, %s237
      %s238 = sphi 0, %s235
      %s239 = sphi 0, %s238
      %s255 = sphi 0, %s239
      %s263 = sphi 0, %s265
      %s266 = sphi 0, %s263
      %s267 = sphi 0, %s266
      %s283 = sphi 0, %s267
      %s291 = sphi 0, %s293
      %s294 = sphi 0, %s291
      %s295 = sphi 0, %s294
      %s311 = sphi 0, %s295
    $region4: #{tpu_custom_call.1} parent=1 // loop_header_branch
      %28 = sbr.rel (%p26) target = $region8
    $region5: #{tpu_custom_call.1} parent=1 // loop_body
      %s30 = ssub.s32 %s25, 1
      %s31 = ssub.s32 %s25, 2
      %s38 = sadd.s32 1, %s33
      %p39 = scmp.ge.s32.totalorder %s38, 1
      %s40 = scalar_select %p39, 0, %s38
      %s41 = sadd.s32 1, %s32
      %s42 = scalar_select %p39, %s41, %s32
      %p43 = scmp.ge.s32.totalorder %s42, 2
      %s44 = scalar_select %p43, 0, %s42
      %s45 = ssub.s32 %s32, %s44
      %p46 = scmp.eq.s32.totalorder %s45, 0
      %s48 = sadd.s32 %s47, 1
      %s49 = scalar_select %p46, %s47, %s48
      %p52 = pneg %p46
      %p53 = scmp.eq.s32.totalorder %s25, 1
      %p54 = por %p52, %p53
      %p55 = scmp.ne.s32.totalorder %s47, %s50
      %p56 = scmp.eq.s32.totalorder %s25, 0
      %p57 = por %p55, %p56
      %p58 = scmp.ne.s32.totalorder %s47, %s50
      %p59 = scmp.eq.s32.totalorder %s30, 1
      %p60 = por %p58, %p59
      %p61 = scmp.ne.s32.totalorder %s50, %s51
      %p62 = scmp.eq.s32.totalorder %s30, 0
      %p63 = por %p61, %p62
      %p64 = scmp.ne.s32.totalorder %s50, %s51
      %p65 = scmp.eq.s32.totalorder %s31, 1
      %p66 = por %p64, %p65
      %p68 = scmp.ne.s32.totalorder %s51, %s67
      %p69 = scmp.eq.s32.totalorder %s31, 0
      %p70 = por %p68, %p69
      %s72 = sadd.s32 %s71, 1
      %p75 = scmp.eq.s32.totalorder %s25, 1
      %p76 = scmp.ne.s32.totalorder %s71, %s73
      %p77 = scmp.eq.s32.totalorder %s25, 0
      %p78 = por %p76, %p77
      %p79 = scmp.ne.s32.totalorder %s71, %s73
      %p80 = scmp.eq.s32.totalorder %s30, 1
      %p81 = por %p79, %p80
      %p82 = scmp.ne.s32.totalorder %s73, %s74
      %p83 = scmp.eq.s32.totalorder %s30, 0
      %p84 = por %p82, %p83
      %p85 = scmp.ne.s32.totalorder %s73, %s74
      %p86 = scmp.eq.s32.totalorder %s31, 1
      %p87 = por %p85, %p86
      %p89 = scmp.ne.s32.totalorder %s74, %s88
      %p90 = scmp.eq.s32.totalorder %s31, 0
      %p91 = por %p89, %p90
      %s93 = sadd.s32 %s92, 1
      %p96 = scmp.eq.s32.totalorder %s25, 1
      %p97 = scmp.ne.s32.totalorder %s92, %s94
      %p98 = scmp.eq.s32.totalorder %s25, 0
      %p99 = por %p97, %p98
      %p100 = scmp.ne.s32.totalorder %s92, %s94
      %p101 = scmp.eq.s32.totalorder %s30, 1
      %p102 = por %p100, %p101
      %p103 = scmp.ne.s32.totalorder %s94, %s95
      %p104 = scmp.eq.s32.totalorder %s30, 0
      %p105 = por %p103, %p104
      %p106 = scmp.ne.s32.totalorder %s94, %s95
      %p107 = scmp.eq.s32.totalorder %s31, 1
      %p108 = por %p106, %p107
      %p110 = scmp.ne.s32.totalorder %s95, %s109
      %p111 = scmp.eq.s32.totalorder %s31, 0
      %p112 = por %p110, %p111
      %s114 = sadd.s32 %s113, 1
      %p117 = scmp.eq.s32.totalorder %s25, 1
      %p118 = scmp.ne.s32.totalorder %s113, %s115
      %p119 = scmp.eq.s32.totalorder %s25, 0
      %p120 = por %p118, %p119
      %p121 = scmp.ne.s32.totalorder %s113, %s115
      %p122 = scmp.eq.s32.totalorder %s30, 1
      %p123 = por %p121, %p122
      %p124 = scmp.ne.s32.totalorder %s115, %s116
      %p125 = scmp.eq.s32.totalorder %s30, 0
      %p126 = por %p124, %p125
      %p127 = scmp.ne.s32.totalorder %s115, %s116
      %p128 = scmp.eq.s32.totalorder %s31, 1
      %p129 = por %p127, %p128
      %p131 = scmp.ne.s32.totalorder %s116, %s130
      %p132 = scmp.eq.s32.totalorder %s31, 0
      %p133 = por %p131, %p132
      %s135 = sadd.s32 %s134, 1
      %p138 = scmp.eq.s32.totalorder %s25, 1
      %p139 = scmp.ne.s32.totalorder %s134, %s136
      %p140 = scmp.eq.s32.totalorder %s25, 0
      %p141 = por %p139, %p140
      %p142 = scmp.ne.s32.totalorder %s134, %s136
      %p143 = scmp.eq.s32.totalorder %s30, 1
      %p144 = por %p142, %p143
      %p145 = scmp.ne.s32.totalorder %s136, %s137
      %p146 = scmp.eq.s32.totalorder %s30, 0
      %p147 = por %p145, %p146
      %p148 = scmp.ne.s32.totalorder %s136, %s137
      %p149 = scmp.eq.s32.totalorder %s31, 1
      %p150 = por %p148, %p149
      %p152 = scmp.ne.s32.totalorder %s137, %s151
      %p153 = scmp.eq.s32.totalorder %s31, 0
      %p154 = por %p152, %p153
      %s155 = ssub.s32 %s33, %s40
      %p156 = scmp.eq.s32.totalorder %s155, 0
      %s158 = sadd.s32 %s157, 1
      %s159 = scalar_select %p156, %s157, %s158
      %p162 = pneg %p156
      %p163 = scmp.eq.s32.totalorder %s25, 1
      %p164 = por %p162, %p163
      %p165 = scmp.ne.s32.totalorder %s157, %s160
      %p166 = scmp.eq.s32.totalorder %s25, 0
      %p167 = por %p165, %p166
      %p168 = scmp.ne.s32.totalorder %s157, %s160
      %p169 = scmp.eq.s32.totalorder %s30, 1
      %p170 = por %p168, %p169
      %p171 = scmp.ne.s32.totalorder %s160, %s161
      %p172 = scmp.eq.s32.totalorder %s30, 0
      %p173 = por %p171, %p172
      %p174 = scmp.ne.s32.totalorder %s160, %s161
      %p175 = scmp.eq.s32.totalorder %s31, 1
      %p176 = por %p174, %p175
      %p178 = scmp.ne.s32.totalorder %s161, %s177
      %p179 = scmp.eq.s32.totalorder %s31, 0
      %p180 = por %p178, %p179
      %s181 = ssub.s32 %s33, %s40
      %p182 = scmp.eq.s32.totalorder %s181, 0
      %s184 = sadd.s32 %s183, 1
      %s185 = scalar_select %p182, %s183, %s184
      %p188 = pneg %p182
      %p189 = scmp.eq.s32.totalorder %s25, 1
      %p190 = por %p188, %p189
      %p191 = scmp.ne.s32.totalorder %s183, %s186
      %p192 = scmp.eq.s32.totalorder %s25, 0
      %p193 = por %p191, %p192
      %p194 = scmp.ne.s32.totalorder %s183, %s186
      %p195 = scmp.eq.s32.totalorder %s30, 1
      %p196 = por %p194, %p195
      %p197 = scmp.ne.s32.totalorder %s186, %s187
      %p198 = scmp.eq.s32.totalorder %s30, 0
      %p199 = por %p197, %p198
      %p200 = scmp.ne.s32.totalorder %s186, %s187
      %p201 = scmp.eq.s32.totalorder %s31, 1
      %p202 = por %p200, %p201
      %p204 = scmp.ne.s32.totalorder %s187, %s203
      %p205 = scmp.eq.s32.totalorder %s31, 0
      %p206 = por %p204, %p205
      %s207 = ssub.s32 %s33, %s40
      %p208 = scmp.eq.s32.totalorder %s207, 0
      %s210 = sadd.s32 %s209, 1
      %s211 = scalar_select %p208, %s209, %s210
      %p214 = pneg %p208
      %p215 = scmp.eq.s32.totalorder %s25, 1
      %p216 = por %p214, %p215
      %p217 = scmp.ne.s32.totalorder %s209, %s212
      %p218 = scmp.eq.s32.totalorder %s25, 0
      %p219 = por %p217, %p218
      %p220 = scmp.ne.s32.totalorder %s209, %s212
      %p221 = scmp.eq.s32.totalorder %s30, 1
      %p222 = por %p220, %p221
      %p223 = scmp.ne.s32.totalorder %s212, %s213
      %p224 = scmp.eq.s32.totalorder %s30, 0
      %p225 = por %p223, %p224
      %p226 = scmp.ne.s32.totalorder %s212, %s213
      %p227 = scmp.eq.s32.totalorder %s31, 1
      %p228 = por %p226, %p227
      %p230 = scmp.ne.s32.totalorder %s213, %s229
      %p231 = scmp.eq.s32.totalorder %s31, 0
      %p232 = por %p230, %p231
      %s233 = ssub.s32 %s33, %s40
      %p234 = scmp.eq.s32.totalorder %s233, 0
      %s236 = sadd.s32 %s235, 1
      %s237 = scalar_select %p234, %s235, %s236
      %p240 = pneg %p234
      %p241 = scmp.eq.s32.totalorder %s25, 1
      %p242 = por %p240, %p241
      %p243 = scmp.ne.s32.totalorder %s235, %s238
      %p244 = scmp.eq.s32.totalorder %s25, 0
      %p245 = por %p243, %p244
      %p246 = scmp.ne.s32.totalorder %s235, %s238
      %p247 = scmp.eq.s32.totalorder %s30, 1
      %p248 = por %p246, %p247
      %p249 = scmp.ne.s32.totalorder %s238, %s239
      %p250 = scmp.eq.s32.totalorder %s30, 0
      %p251 = por %p249, %p250
      %p252 = scmp.ne.s32.totalorder %s238, %s239
      %p253 = scmp.eq.s32.totalorder %s31, 1
      %p254 = por %p252, %p253
      %p256 = scmp.ne.s32.totalorder %s239, %s255
      %p257 = scmp.eq.s32.totalorder %s31, 0
      %p258 = por %p256, %p257
      %s259 = ssub.s32 %s32, %s44
      %s260 = ssub.s32 %s33, %s40
      %s261 = sor.u32 %s259, %s260
      %p262 = scmp.eq.s32.totalorder %s261, 0
      %s264 = sadd.s32 %s263, 1
      %s265 = scalar_select %p262, %s263, %s264
      %p268 = pneg %p262
      %p269 = scmp.eq.s32.totalorder %s25, 1
      %p270 = por %p268, %p269
      %p271 = scmp.ne.s32.totalorder %s263, %s266
      %p272 = scmp.eq.s32.totalorder %s25, 0
      %p273 = por %p271, %p272
      %p274 = scmp.ne.s32.totalorder %s263, %s266
      %p275 = scmp.eq.s32.totalorder %s30, 1
      %p276 = por %p274, %p275
      %p277 = scmp.ne.s32.totalorder %s266, %s267
      %p278 = scmp.eq.s32.totalorder %s30, 0
      %p279 = por %p277, %p278
      %p280 = scmp.ne.s32.totalorder %s266, %s267
      %p281 = scmp.eq.s32.totalorder %s31, 1
      %p282 = por %p280, %p281
      %p284 = scmp.ne.s32.totalorder %s267, %s283
      %p285 = scmp.eq.s32.totalorder %s31, 0
      %p286 = por %p284, %p285
      %s287 = ssub.s32 %s32, %s44
      %s288 = ssub.s32 %s33, %s40
      %s289 = sor.u32 %s287, %s288
      %p290 = scmp.eq.s32.totalorder %s289, 0
      %s292 = sadd.s32 %s291, 1
      %s293 = scalar_select %p290, %s291, %s292
      %p296 = pneg %p290
      %p297 = scmp.eq.s32.totalorder %s25, 1
      %p298 = por %p296, %p297
      %p299 = scmp.ne.s32.totalorder %s291, %s294
      %p300 = scmp.eq.s32.totalorder %s25, 0
      %p301 = por %p299, %p300
      %p302 = scmp.ne.s32.totalorder %s291, %s294
      %p303 = scmp.eq.s32.totalorder %s30, 1
      %p304 = por %p302, %p303
      %p305 = scmp.ne.s32.totalorder %s294, %s295
      %p306 = scmp.eq.s32.totalorder %s30, 0
      %p307 = por %p305, %p306
      %p308 = scmp.ne.s32.totalorder %s294, %s295
      %p309 = scmp.eq.s32.totalorder %s31, 1
      %p310 = por %p308, %p309
      %p312 = scmp.ne.s32.totalorder %s295, %s311
      %p313 = scmp.eq.s32.totalorder %s31, 0
      %p314 = por %p312, %p313
      %p315 = scmp.le.s32.totalorder 1, %s25
      %p316 = scmp.lt.s32.totalorder %s25, 3
      %p317 = pnand %p315, %p316
      %p318 = pneg %p317
      // Predicated region
      $region9: #{tpu_custom_call.1} parent=5 // pred_check
        _
      $region10: #{tpu_custom_call.1} parent=5 // pred_check_branch
        %320 = sbr.rel (%p317) target = $region12
      $region11: #{tpu_custom_call.1} parent=5 // pred_region
        %s321 = ssub.s32 %s25, 1
        // Predicated region
        $region13: #{tpu_custom_call.1} parent=11 // pred_check
          %p322 = pneg %p84
        $region14: #{tpu_custom_call.1} parent=11 // pred_check_branch
          %324 = sbr.rel (%p322) target = $region16
        $region15: #{tpu_custom_call.1} parent=11 // pred_region
          _
        $region16: #{tpu_custom_call.1} parent=11 // pred_fallthru
          _
        // Predicated region
        $region17: #{tpu_custom_call.1} parent=11 // pred_check
          %p325 = pneg %p105
        $region18: #{tpu_custom_call.1} parent=11 // pred_check_branch
          %327 = sbr.rel (%p325) target = $region20
        $region19: #{tpu_custom_call.1} parent=11 // pred_region
          _
        $region20: #{tpu_custom_call.1} parent=11 // pred_fallthru
          _
        // Predicated region
        $region21: #{tpu_custom_call.1} parent=11 // pred_check
          %p328 = pneg %p126
        $region22: #{tpu_custom_call.1} parent=11 // pred_check_branch
          %330 = sbr.rel (%p328) target = $region24
        $region23: #{tpu_custom_call.1} parent=11 // pred_region
          %332 = vsyncadd [#allocation4], 0
          %s333 = sshll.u32 %s3, 4
          %s334 = int_to_ptr.hbm [resolvable:$true] %s333
          %s335 = sshll.u32 [#allocation3], 4
          %s336 = int_to_ptr.vmem [resolvable:$true] %s335
          %341 = dma.hbm_to_vmem [thread:$0]  %s334, 1024, %s336, [#allocation4], 64, 64, 4
        $region24: #{tpu_custom_call.1} parent=11 // pred_fallthru
          _
        // Predicated region
        $region25: #{tpu_custom_call.1} parent=11 // pred_check
          %p342 = pneg %p147
        $region26: #{tpu_custom_call.1} parent=11 // pred_check_branch
          %344 = sbr.rel (%p342) target = $region28
        $region27: #{tpu_custom_call.1} parent=11 // pred_region
          _
        $region28: #{tpu_custom_call.1} parent=11 // pred_fallthru
          _
        // Predicated region
        $region29: #{tpu_custom_call.1} parent=11 // pred_check
          %p345 = pneg %p173
        $region30: #{tpu_custom_call.1} parent=11 // pred_check_branch
          %347 = sbr.rel (%p345) target = $region32
        $region31: #{tpu_custom_call.1} parent=11 // pred_region
          %349 = vsyncadd [#allocation7], 0
          %s350 = smul.addr %s35, 4
          %s351 = scalar_lea.hbm %s5, %s350
          %s352 = sshll.u32 %s351, 4
          %s353 = int_to_ptr.hbm [resolvable:$true] %s352
          %s354 = sshll.u32 [#allocation6], 4
          %s355 = int_to_ptr.vmem [resolvable:$true] %s354
          %360 = dma.hbm_to_vmem [thread:$0]  %s353, 1024, %s355, [#allocation7], 64, 64, 4
        $region32: #{tpu_custom_call.1} parent=11 // pred_fallthru
          _
        // Predicated region
        $region33: #{tpu_custom_call.1} parent=11 // pred_check
          %p361 = pneg %p199
        $region34: #{tpu_custom_call.1} parent=11 // pred_check_branch
          %363 = sbr.rel (%p361) target = $region36
        $region35: #{tpu_custom_call.1} parent=11 // pred_region
          %p364 = scmp.lt.s32.totalorder %s35, 0
          %s365 = scalar_select %p364, %s35, 0
          %s366 = scalar_lea.vmem %s6, %s365
        $region36: #{tpu_custom_call.1} parent=11 // pred_fallthru
          _
        // Predicated region
        $region37: #{tpu_custom_call.1} parent=11 // pred_check
          %p367 = pneg %p225
        $region38: #{tpu_custom_call.1} parent=11 // pred_check_branch
          %369 = sbr.rel (%p367) target = $region40
        $region39: #{tpu_custom_call.1} parent=11 // pred_region
          %371 = vsyncadd [#allocation7], 0
          %s372 = smul.addr %s35, 4
          %s373 = scalar_lea.hbm %s7, %s372
          %s374 = sshll.u32 %s373, 4
          %s375 = int_to_ptr.hbm [resolvable:$true] %s374
          %s376 = sshll.u32 [#allocation8], 4
          %s377 = int_to_ptr.vmem [resolvable:$true] %s376
          %382 = dma.hbm_to_vmem [thread:$0]  %s375, 1024, %s377, [#allocation7], 64, 64, 4
        $region40: #{tpu_custom_call.1} parent=11 // pred_fallthru
          _
        // Predicated region
        $region41: #{tpu_custom_call.1} parent=11 // pred_check
          %p383 = pneg %p251
        $region42: #{tpu_custom_call.1} parent=11 // pred_check_branch
          %385 = sbr.rel (%p383) target = $region44
        $region43: #{tpu_custom_call.1} parent=11 // pred_region
          %p386 = scmp.lt.s32.totalorder %s35, 0
          %s387 = scalar_select %p386, %s35, 0
          %s388 = scalar_lea.vmem %s8, %s387
        $region44: #{tpu_custom_call.1} parent=11 // pred_fallthru
          _
      $region12: #{tpu_custom_call.1} parent=5 // pred_fallthru
        _
      %p389 = scmp.lt.s32.totalorder %s25, 2
      // Predicated region
      $region45: #{tpu_custom_call.1} parent=5 // pred_check
        %p390 = pneg %p389
      $region46: #{tpu_custom_call.1} parent=5 // pred_check_branch
        %392 = sbr.rel (%p390) target = $region48
      $region47: #{tpu_custom_call.1} parent=5 // pred_region
        // Predicated region
        $region49: #{tpu_custom_call.1} parent=47 // pred_check
          %p393 = pneg %p57
        $region50: #{tpu_custom_call.1} parent=47 // pred_check_branch
          %395 = sbr.rel (%p393) target = $region52
        $region51: #{tpu_custom_call.1} parent=47 // pred_region
          %p396 = scmp.lt.s32.totalorder %s32, 1
          %s397 = scalar_select %p396, %s32, 1
          %s398 = smul.addr %s397, 4
          %s399 = scalar_lea.vmem %s0, %s398
        $region52: #{tpu_custom_call.1} parent=47 // pred_fallthru
          _
      $region48: #{tpu_custom_call.1} parent=5 // pred_fallthru
        _
      %p400 = scmp.le.s32.totalorder 1, %s25
      %p401 = scmp.lt.s32.totalorder %s25, 3
      %p402 = pnand %p400, %p401
      %p403 = pneg %p402
      // Predicated region
      $region53: #{tpu_custom_call.1} parent=5 // pred_check
        _
      $region54: #{tpu_custom_call.1} parent=5 // pred_check_branch
        %405 = sbr.rel (%p402) target = $region56
      $region55: #{tpu_custom_call.1} parent=5 // pred_region
        %s406 = ssub.s32 %s25, 1
        // Predicated region
        $region57: #{tpu_custom_call.1} parent=55 // pred_check
          %p407 = pneg %p126
        $region58: #{tpu_custom_call.1} parent=55 // pred_check_branch
          %409 = sbr.rel (%p407) target = $region60
        $region59: #{tpu_custom_call.1} parent=55 // pred_region
          %411 = dma.done [#allocation4], 1024
        $region60: #{tpu_custom_call.1} parent=55 // pred_fallthru
          _
        // Predicated region
        $region61: #{tpu_custom_call.1} parent=55 // pred_check
          %p412 = pneg %p173
        $region62: #{tpu_custom_call.1} parent=55 // pred_check_branch
          %414 = sbr.rel (%p412) target = $region64
        $region63: #{tpu_custom_call.1} parent=55 // pred_region
          %416 = dma.done [#allocation7], 1024
        $region64: #{tpu_custom_call.1} parent=55 // pred_fallthru
          _
        // Predicated region
        $region65: #{tpu_custom_call.1} parent=55 // pred_check
          %p417 = pneg %p225
        $region66: #{tpu_custom_call.1} parent=55 // pred_check_branch
          %419 = sbr.rel (%p417) target = $region68
        $region67: #{tpu_custom_call.1} parent=55 // pred_region
          %421 = dma.done [#allocation7], 1024
        $region68: #{tpu_custom_call.1} parent=55 // pred_fallthru
          _
        %p422 = scmp.lt.s32.totalorder %s34, 1
        %s423 = scalar_select %p422, %s34, 1
        %s424 = smul.addr %s423, 4
        %s425 = scalar_lea.vmem %s0, %s424
        %p426 = pneg %p63
        %p427 = pneg %p60
        %p428 = pneg %p84
        %p429 = pneg %p81
        %p430 = pneg %p105
        %p431 = pneg %p102
        %p432 = pneg %p126
        %p433 = pneg %p123
        %p434 = pneg %p147
        %p435 = pneg %p144
        %p436 = pneg %p173
        %p437 = pneg %p170
        %p438 = scmp.lt.s32.totalorder %s35, 0
        %s439 = scalar_select %p438, %s35, 0
        %s440 = scalar_lea.vmem %s6, %s439
        %p441 = pneg %p199
        %p442 = pneg %p196
        %p443 = pneg %p225
        %p444 = pneg %p222
        %p445 = scmp.lt.s32.totalorder %s35, 0
        %s446 = scalar_select %p445, %s35, 0
        %s447 = scalar_lea.vmem %s8, %s446
        %p448 = pneg %p251
        %p449 = pneg %p248
        %p450 = pneg %p279
        %p451 = pneg %p276
        %s452 = sand.u32 %s266, 1
        %s453 = scalar_lea.sflag [#allocation5], %s452
        %s454 = sand.u32 %s266, 1
        %s455 = smul.addr %s454, 8
        %s456 = scalar_lea.vmem [#allocation9], %s455
        %p457 = pneg %p307
        %p458 = pneg %p304
        %s459 = sand.u32 %s294, 1
        %s460 = scalar_lea.sflag [#allocation11], %s459
        %s461 = sand.u32 %s294, 1
        %s462 = smul.addr %s461, 8
        %s463 = scalar_lea.vmem [#allocation10], %s462
        %p464 = scmp.lt.s32.totalorder %s34, 1
        %s465 = scalar_select %p464, %s34, 1
        %s466 = smul.addr %s465, 4
        %s467 = scalar_lea.vmem %s0, %s466
        %p468 = scmp.lt.s32.totalorder %s35, 0
        %s469 = scalar_select %p468, %s35, 0
        %s470 = scalar_lea.vmem %s6, %s469
        %p471 = scmp.lt.s32.totalorder %s35, 0
        %s472 = scalar_select %p471, %s35, 0
        %s473 = scalar_lea.vmem %s8, %s472
        %p475 = scmp.eq.s32.totalorder %s35, 0
        // Predicated region
        $region69: #{tpu_custom_call.1} parent=55 // pred_check
          %p476 = pneg %p475
        $region70: #{tpu_custom_call.1} parent=55 // pred_check_branch
          %478 = sbr.rel (%p476) target = $region72
        $region71: #{tpu_custom_call.1} parent=55 // pred_region
          %v479 = vld [vmem:[%s467] sm:$0xf]
          %v480 = vld [vmem:[%s1] sm:$0xf]
          %v481 = vld [vmem:[%s2] sm:$0x1]
          %v483 = vperm.slane %v481, 0
          %vm485 = vcmask 64512
          %v487 = vsel %vm485, %v479, 0
          %vm489 = vcmask 1043456
          %v491 = vsel %vm489, %v480, 0
          %493 = vmatpush.bf16.msra.mxu0 0
          %494 = vmatpush.bf16.msra.mxu0 0
          %495 = vmatpush.bf16.msra.mxu0 0
          %496 = vmatpush.bf16.msra.mxu0 0
          %497 = vmatpush.bf16.msra.mxu0 0
          %498 = vmatpush.bf16.msra.mxu0 0
          %499 = vmatpush.bf16.msra.mxu0 0
          %500 = vmatpush.bf16.msra.mxu0 %v491
          %501 = vmatmul.bf16.gmra.mxu0 %v487
          %v502 = vpop.f32.mrf.mxu0
          %v503 = vadd.f32 %v483, %v502
          %v504 = vpop.f32.mrf.mxu0
          %505 = vdwg.mxu0
          %v506 = vmax.f32 %v503, 0.0
          %v507 = vpack.c.bf16 %v506, %v506
          %v508 = vld [vmem:[#allocation3] sm:$0xf]
          %v509 = vld [vmem:[#allocation3 + $0x4] sm:$0xf]
          %v510 = vld [vmem:[#allocation3 + $0x8] sm:$0xf]
          %v511 = vld [vmem:[#allocation3 + $0xc] sm:$0xf]
          %v512 = vld [vmem:[#allocation3 + $0x10] sm:$0xf]
          %v513 = vld [vmem:[#allocation3 + $0x14] sm:$0xf]
          %v514 = vld [vmem:[#allocation3 + $0x18] sm:$0xf]
          %v515 = vld [vmem:[#allocation3 + $0x1c] sm:$0xf]
          %v516 = vld [vmem:[#allocation3 + $0x20] sm:$0xf]
          %v517 = vld [vmem:[#allocation3 + $0x24] sm:$0xf]
          %v518 = vld [vmem:[#allocation3 + $0x28] sm:$0xf]
          %v519 = vld [vmem:[#allocation3 + $0x2c] sm:$0xf]
          %v520 = vld [vmem:[#allocation3 + $0x30] sm:$0xf]
          %v521 = vld [vmem:[#allocation3 + $0x34] sm:$0xf]
          %v522 = vld [vmem:[#allocation3 + $0x38] sm:$0xf]
          %v523 = vld [vmem:[#allocation3 + $0x3c] sm:$0xf]
          %v524 = vld [vmem:[%s4] sm:$0x1]
          %v526 = vperm.slane %v524, 0
          %v544 = vunpack.c.l.b16 %v508
          %v545 = vunpack.c.l.b16 %v509
          %v546 = vunpack.c.l.b16 %v510
          %v547 = vunpack.c.l.b16 %v511
          %v548 = vunpack.c.l.b16 %v512
          %v549 = vunpack.c.l.b16 %v513
          %v550 = vunpack.c.l.b16 %v514
          %v551 = vunpack.c.l.b16 %v515
          %v552 = vunpack.c.l.b16 %v516
          %v553 = vunpack.c.l.b16 %v517
          %v554 = vunpack.c.l.b16 %v518
          %v555 = vunpack.c.l.b16 %v519
          %v556 = vunpack.c.l.b16 %v520
          %v557 = vunpack.c.l.b16 %v521
          %v558 = vunpack.c.l.b16 %v522
          %v559 = vunpack.c.l.b16 %v523
          %v560 = vpack.c.b16 %v545, %v544
          %v561 = vpack.c.b16 %v547, %v546
          %v562 = vpack.c.b16 %v549, %v548
          %v563 = vpack.c.b16 %v551, %v550
          %v564 = vpack.c.b16 %v553, %v552
          %v565 = vpack.c.b16 %v555, %v554
          %v566 = vpack.c.b16 %v557, %v556
          %v567 = vpack.c.b16 %v559, %v558
          %576 = vmatpush.bf16.msra.mxu0 %v567
          %577 = vmatpush.bf16.msra.mxu0 %v566
          %578 = vmatpush.bf16.msra.mxu0 %v565
          %579 = vmatpush.bf16.msra.mxu0 %v564
          %580 = vmatpush.bf16.msra.mxu0 %v563
          %581 = vmatpush.bf16.msra.mxu0 %v562
          %582 = vmatpush.bf16.msra.mxu0 %v561
          %583 = vmatpush.bf16.msra.mxu0 %v560
          %584 = vmatmul.bf16.gmra.mxu0 %v507
          %v585 = vpop.f32.mrf.mxu0
          %v586 = vadd.f32 %v526, %v585
          %v587 = vpop.f32.mrf.mxu0
          %588 = vdwg.mxu0
          %v589 = vmax.f32 %v586, 0.0
          %v590 = vpack.c.bf16 %v589, %v589
          %591 = vst [vmem:[#allocation2] sm:$0xf] %v590
        $region72: #{tpu_custom_call.1} parent=55 // pred_fallthru
          _
        %v592 = vld [vmem:[#allocation2] sm:$0xf]
        %v593 = vld [vmem:[#allocation6] sm:$0xf]
        %v594 = vld [vmem:[#allocation6 + $0x4] sm:$0xf]
        %v595 = vld [vmem:[#allocation6 + $0x8] sm:$0xf]
        %v596 = vld [vmem:[#allocation6 + $0xc] sm:$0xf]
        %v597 = vld [vmem:[#allocation6 + $0x10] sm:$0xf]
        %v598 = vld [vmem:[#allocation6 + $0x14] sm:$0xf]
        %v599 = vld [vmem:[#allocation6 + $0x18] sm:$0xf]
        %v600 = vld [vmem:[#allocation6 + $0x1c] sm:$0xf]
        %v601 = vld [vmem:[#allocation6 + $0x20] sm:$0xf]
        %v602 = vld [vmem:[#allocation6 + $0x24] sm:$0xf]
        %v603 = vld [vmem:[#allocation6 + $0x28] sm:$0xf]
        %v604 = vld [vmem:[#allocation6 + $0x2c] sm:$0xf]
        %v605 = vld [vmem:[#allocation6 + $0x30] sm:$0xf]
        %v606 = vld [vmem:[#allocation6 + $0x34] sm:$0xf]
        %v607 = vld [vmem:[#allocation6 + $0x38] sm:$0xf]
        %v608 = vld [vmem:[#allocation6 + $0x3c] sm:$0xf]
        %v609 = vld [vmem:[%s470] sm:$0x1]
        %v611 = vperm.slane %v609, 0
        %v629 = vunpack.c.l.b16 %v593
        %v630 = vunpack.c.l.b16 %v594
        %v631 = vunpack.c.l.b16 %v595
        %v632 = vunpack.c.l.b16 %v596
        %v633 = vunpack.c.l.b16 %v597
        %v634 = vunpack.c.l.b16 %v598
        %v635 = vunpack.c.l.b16 %v599
        %v636 = vunpack.c.l.b16 %v600
        %v637 = vunpack.c.l.b16 %v601
        %v638 = vunpack.c.l.b16 %v602
        %v639 = vunpack.c.l.b16 %v603
        %v640 = vunpack.c.l.b16 %v604
        %v641 = vunpack.c.l.b16 %v605
        %v642 = vunpack.c.l.b16 %v606
        %v643 = vunpack.c.l.b16 %v607
        %v644 = vunpack.c.l.b16 %v608
        %v645 = vpack.c.b16 %v630, %v629
        %v646 = vpack.c.b16 %v632, %v631
        %v647 = vpack.c.b16 %v634, %v633
        %v648 = vpack.c.b16 %v636, %v635
        %v649 = vpack.c.b16 %v638, %v637
        %v650 = vpack.c.b16 %v640, %v639
        %v651 = vpack.c.b16 %v642, %v641
        %v652 = vpack.c.b16 %v644, %v643
        %661 = vmatpush.bf16.msra.mxu0 %v652
        %662 = vmatpush.bf16.msra.mxu0 %v651
        %663 = vmatpush.bf16.msra.mxu0 %v650
        %664 = vmatpush.bf16.msra.mxu0 %v649
        %665 = vmatpush.bf16.msra.mxu0 %v648
        %666 = vmatpush.bf16.msra.mxu0 %v647
        %667 = vmatpush.bf16.msra.mxu0 %v646
        %668 = vmatpush.bf16.msra.mxu0 %v645
        %669 = vmatmul.bf16.gmra.mxu0 %v592
        %v670 = vpop.f32.mrf.mxu0
        %v671 = vadd.f32 %v611, %v670
        %v672 = vpop.f32.mrf.mxu0
        %673 = vdwg.mxu0
        %v674 = vld [vmem:[#allocation8] sm:$0xf]
        %v675 = vld [vmem:[#allocation8 + $0x4] sm:$0xf]
        %v676 = vld [vmem:[#allocation8 + $0x8] sm:$0xf]
        %v677 = vld [vmem:[#allocation8 + $0xc] sm:$0xf]
        %v678 = vld [vmem:[#allocation8 + $0x10] sm:$0xf]
        %v679 = vld [vmem:[#allocation8 + $0x14] sm:$0xf]
        %v680 = vld [vmem:[#allocation8 + $0x18] sm:$0xf]
        %v681 = vld [vmem:[#allocation8 + $0x1c] sm:$0xf]
        %v682 = vld [vmem:[#allocation8 + $0x20] sm:$0xf]
        %v683 = vld [vmem:[#allocation8 + $0x24] sm:$0xf]
        %v684 = vld [vmem:[#allocation8 + $0x28] sm:$0xf]
        %v685 = vld [vmem:[#allocation8 + $0x2c] sm:$0xf]
        %v686 = vld [vmem:[#allocation8 + $0x30] sm:$0xf]
        %v687 = vld [vmem:[#allocation8 + $0x34] sm:$0xf]
        %v688 = vld [vmem:[#allocation8 + $0x38] sm:$0xf]
        %v689 = vld [vmem:[#allocation8 + $0x3c] sm:$0xf]
        %v690 = vld [vmem:[%s473] sm:$0x1]
        %v692 = vperm.slane %v690, 0
        %v710 = vunpack.c.l.b16 %v674
        %v711 = vunpack.c.l.b16 %v675
        %v712 = vunpack.c.l.b16 %v676
        %v713 = vunpack.c.l.b16 %v677
        %v714 = vunpack.c.l.b16 %v678
        %v715 = vunpack.c.l.b16 %v679
        %v716 = vunpack.c.l.b16 %v680
        %v717 = vunpack.c.l.b16 %v681
        %v718 = vunpack.c.l.b16 %v682
        %v719 = vunpack.c.l.b16 %v683
        %v720 = vunpack.c.l.b16 %v684
        %v721 = vunpack.c.l.b16 %v685
        %v722 = vunpack.c.l.b16 %v686
        %v723 = vunpack.c.l.b16 %v687
        %v724 = vunpack.c.l.b16 %v688
        %v725 = vunpack.c.l.b16 %v689
        %v726 = vpack.c.b16 %v711, %v710
        %v727 = vpack.c.b16 %v713, %v712
        %v728 = vpack.c.b16 %v715, %v714
        %v729 = vpack.c.b16 %v717, %v716
        %v730 = vpack.c.b16 %v719, %v718
        %v731 = vpack.c.b16 %v721, %v720
        %v732 = vpack.c.b16 %v723, %v722
        %v733 = vpack.c.b16 %v725, %v724
        %742 = vmatpush.bf16.msra.mxu0 %v733
        %743 = vmatpush.bf16.msra.mxu0 %v732
        %744 = vmatpush.bf16.msra.mxu0 %v731
        %745 = vmatpush.bf16.msra.mxu0 %v730
        %746 = vmatpush.bf16.msra.mxu0 %v729
        %747 = vmatpush.bf16.msra.mxu0 %v728
        %748 = vmatpush.bf16.msra.mxu0 %v727
        %749 = vmatpush.bf16.msra.mxu0 %v726
        %750 = vmatmul.bf16.gmra.mxu0 %v592
        %v751 = vpop.f32.mrf.mxu0
        %v752 = vadd.f32 %v692, %v751
        %v753 = vpop.f32.mrf.mxu0
        %754 = vdwg.mxu0
        %v755 = vmul.f32 %v671, 1.442695
        %v756 = vpow.pop %v755
        %v757 = vmax.f32 %v756, 1e-05
        %v758 = vmin.f32 %v757, 1000000.0
        %759 = vst [vmem:[%s456] sm:$0xff] %v758
        %v760 = vmax.f32 %v752, 0.0
        %v761 = vand.u32 2147483647, %v752
        %v762 = vsub.f32 0.0, %v761
        %v763 = vmul.f32 %v762, 1.442695
        %v764 = vpow.pop %v763
        %v765 = vadd.f32 %v764, 1.0
        %v766 = vlog2.pop %v765
        %v767 = vmul.f32 %v766, 0.6931472
        %v768 = vmul.f32 -0.5, %v764
        %v769 = vadd.f32 %v768, 1.0
        %v770 = vmul.f32 %v769, %v764
        %v771 = vand.u32 2147483647, %v764
        %vm772 = vcmp.lt.f32.partialorder %v771, 0.0004427343
        %v773 = vsel %vm772, %v770, %v767
        %v774 = vadd.f32 %v760, %v773
        %v775 = vmax.f32 %v774, 0.0001
        %v776 = vmin.f32 %v775, 10000.0
        %777 = vst [vmem:[%s463] sm:$0xff] %v776
        %s778 = sand.u32 %s266, 1
        %s779 = scalar_lea.sflag [#allocation5], %s778
        %s780 = sand.u32 %s266, 1
        %s781 = smul.addr %s780, 8
        %s782 = scalar_lea.vmem [#allocation9], %s781
        %s783 = sand.u32 %s294, 1
        %s784 = scalar_lea.sflag [#allocation11], %s783
        %s785 = sand.u32 %s294, 1
        %s786 = smul.addr %s785, 8
        %s787 = scalar_lea.vmem [#allocation10], %s786
        // Predicated region
        $region73: #{tpu_custom_call.1} parent=55 // pred_check
          %p788 = pneg %p276
        $region74: #{tpu_custom_call.1} parent=55 // pred_check_branch
          %790 = sbr.rel (%p788) target = $region76
        $region75: #{tpu_custom_call.1} parent=55 // pred_region
          %792 = vsyncadd %s779, 0
          %s793 = sadd.s32 %s35, %s34
          %s794 = smul.addr %s793, 8
          %s795 = scalar_lea.hbm %s9, %s794
          %s797 = sshll.u32 %s782, 4
          %s798 = int_to_ptr.vmem [resolvable:$true] %s797
          %s799 = sshll.u32 %s795, 4
          %s800 = int_to_ptr.hbm [resolvable:$true] %s799
          %802 = dma.vmem_to_hbm [thread:$0]  %s798, 128, %s800, %s779
        $region76: #{tpu_custom_call.1} parent=55 // pred_fallthru
          _
        // Predicated region
        $region77: #{tpu_custom_call.1} parent=55 // pred_check
          %p803 = pneg %p304
        $region78: #{tpu_custom_call.1} parent=55 // pred_check_branch
          %805 = sbr.rel (%p803) target = $region80
        $region79: #{tpu_custom_call.1} parent=55 // pred_region
          %807 = vsyncadd %s784, 0
          %s808 = sadd.s32 %s35, %s34
          %s809 = smul.addr %s808, 8
          %s810 = scalar_lea.hbm %s10, %s809
          %s812 = sshll.u32 %s787, 4
          %s813 = int_to_ptr.vmem [resolvable:$true] %s812
          %s814 = sshll.u32 %s810, 4
          %s815 = int_to_ptr.hbm [resolvable:$true] %s814
          %817 = dma.vmem_to_hbm [thread:$0]  %s813, 128, %s815, %s784
        $region80: #{tpu_custom_call.1} parent=55 // pred_fallthru
          _
      $region56: #{tpu_custom_call.1} parent=5 // pred_fallthru
        _
      %p818 = scmp.le.s32.totalorder 2, %s25
      // Predicated region
      $region81: #{tpu_custom_call.1} parent=5 // pred_check
        %p819 = pneg %p818
      $region82: #{tpu_custom_call.1} parent=5 // pred_check_branch
        %821 = sbr.rel (%p819) target = $region84
      $region83: #{tpu_custom_call.1} parent=5 // pred_region
        %s822 = ssub.s32 %s25, 2
        // Predicated region
        $region85: #{tpu_custom_call.1} parent=83 // pred_check
          %p823 = pneg %p282
        $region86: #{tpu_custom_call.1} parent=83 // pred_check_branch
          %825 = sbr.rel (%p823) target = $region88
        $region87: #{tpu_custom_call.1} parent=83 // pred_region
          %s826 = sand.u32 %s267, 1
          %s827 = scalar_lea.sflag [#allocation5], %s826
          %s828 = sand.u32 %s267, 1
          %s829 = smul.addr %s828, 8
          %s830 = scalar_lea.vmem [#allocation9], %s829
          %832 = dma.done %s827, 128
        $region88: #{tpu_custom_call.1} parent=83 // pred_fallthru
          _
        // Predicated region
        $region89: #{tpu_custom_call.1} parent=83 // pred_check
          %p833 = pneg %p310
        $region90: #{tpu_custom_call.1} parent=83 // pred_check_branch
          %835 = sbr.rel (%p833) target = $region92
        $region91: #{tpu_custom_call.1} parent=83 // pred_region
          %s836 = sand.u32 %s295, 1
          %s837 = scalar_lea.sflag [#allocation11], %s836
          %s838 = sand.u32 %s295, 1
          %s839 = smul.addr %s838, 8
          %s840 = scalar_lea.vmem [#allocation10], %s839
          %842 = dma.done %s837, 128
        $region92: #{tpu_custom_call.1} parent=83 // pred_fallthru
          _
      $region84: #{tpu_custom_call.1} parent=5 // pred_fallthru
        _
    $region6: #{tpu_custom_call.1} parent=1 // loop_footer
      %s29 = sadd.s32 1, %s25
    $region7: #{tpu_custom_call.1} parent=1 // loop_footer_branch
      %24 = sbr.rel target = $region3
    $region8: #{tpu_custom_call.1} parent=1 // loop_exit
      _
    %843 = vsyncpa [#allocation4], 1
    %s844 = scalar_lea.sflag [#allocation4], 1
    %845 = vsyncpa %s844, 1
    %846 = vsyncpa [#allocation7], 1
    %847 = vsyncpa [#allocation5], 1
    %s848 = scalar_lea.sflag [#allocation5], 1
    %849 = vsyncpa %s848, 1
    %850 = vsyncpa [#allocation11], 1
    %s851 = scalar_lea.sflag [#allocation11], 1
    %852 = vsyncpa %s851, 1

</llo_original>
